<compile_context>
chip_gen: v5e
topology: v5e:2x2
jax: 0.10.0
libtpu: 0.0.40
codegen_flags: <defaults>
</compile_context>

<pallas_src>
import functools
import math

import jax
import jax.numpy as jnp
from jax.experimental import pallas as pl
from jax.experimental.pallas import tpu as pltpu

D_MODEL = 32
N_HEADS = 4
D_FF = 64
N_LAYERS = 2
EPS = 1e-6  # Annotated-Transformer LayerNorm eps


def _layer_norm(x, g, b):
    # Annotated Transformer LayerNorm: g * (x - mean) / (std + eps) + b,
    # where std is torch's default *unbiased* std (ddof=1).
    d = x.shape[-1]
    mean = jnp.mean(x, axis=-1, keepdims=True)
    var = jnp.sum((x - mean) ** 2, axis=-1, keepdims=True) * (1.0 / (d - 1))
    inv = pl.reciprocal(jnp.sqrt(var) + EPS, approx=True)  # EUP slot, not a VPU divide
    return g * (x - mean) * inv + b


def encoder_kernel(x_ref, mask_ref,
                   ln1_g_ref, ln1_b_ref,
                   wq_ref, bq_ref, wk_ref, bk_ref, wv_ref, bv_ref,
                   wo_ref, bo_ref,
                   ln2_g_ref, ln2_b_ref,
                   w1_ref, b1_ref, w2_ref, b2_ref,
                   y_ref, *, n_layers, n_heads):
    x = x_ref[0].astype(jnp.float32)          # (S, D)   one batch row
    mask = mask_ref[0].astype(jnp.float32)    # (1, S)   key mask, broadcast over heads/queries
    S, D = x.shape
    H = n_heads
    dk = D // H
    scale = 1.0 / math.sqrt(dk)

    mask_is_zero = mask == 0.0                # hoisted: one compare per kernel invocation

    for l in range(n_layers):                 # static unroll: all layers fused in one call
        # ---- Sublayer 1: x + SelfAttn(LayerNorm(x))  (dropout == identity) ----
        xn = _layer_norm(x, ln1_g_ref[l], ln1_b_ref[l])
        xn_h = jnp.broadcast_to(xn[None, :, :], (H, S, D))   # leading-dim broadcast only

        # All heads in one batched matmul each: (H,S,D) x (H,D,dk) -> (H,S,dk).
        q = jnp.einsum('hsd,hdk->hsk', xn_h, wq_ref[l],
                       preferred_element_type=jnp.float32) + bq_ref[l]
        k = jnp.einsum('hsd,hdk->hsk', xn_h, wk_ref[l],
                       preferred_element_type=jnp.float32) + bk_ref[l]
        v = jnp.einsum('hsd,hdk->hsk', xn_h, wv_ref[l],
                       preferred_element_type=jnp.float32) + bv_ref[l]

        scores = jnp.einsum('hqd,hkd->hqk', q, k,
                            preferred_element_type=jnp.float32) * scale   # (H,S,S)
        scores = jnp.where(mask_is_zero, -1e9, scores)   # masked_fill(mask == 0, -1e9)

        m = jnp.max(scores, axis=-1, keepdims=True)
        e = jnp.exp(scores - m)
        p = e * pl.reciprocal(jnp.sum(e, axis=-1, keepdims=True), approx=True)  # softmax

        ctx = jnp.einsum('hqk,hkd->hqd', p, v,
                         preferred_element_type=jnp.float32)              # (H,S,dk)
        # Output projection folded per head and summed (== concat(heads) @ Wo).
        proj = jnp.einsum('hsd,hdo->hso', ctx, wo_ref[l],
                          preferred_element_type=jnp.float32)             # (H,S,D)
        x = x + jnp.sum(proj, axis=0) + bo_ref[l]

        # ---- Sublayer 2: x + FFN(LayerNorm(x)) ----
        xn2 = _layer_norm(x, ln2_g_ref[l], ln2_b_ref[l])
        h1 = jnp.dot(xn2, w1_ref[l], preferred_element_type=jnp.float32) + b1_ref[l]
        h1 = jnp.maximum(h1, 0.0)                            # ReLU
        x = x + jnp.dot(h1, w2_ref[l], preferred_element_type=jnp.float32) + b2_ref[l]

    # TODO(synk): at realistic D (>=512) present the output store lane-dense
    # (last dim a multiple of 128) and consider bf16 MXU operands on v6e/v7x.
    y_ref[0] = x.astype(y_ref.dtype)


@jax.jit
def encoder_forward(x, mask, params):
    """x: (B, S, D) f32; mask: (B, 1, S) f32 (1 = keep, 0 = mask); params: list of per-layer dicts."""
    B, S, D = x.shape
    L = len(params)
    H = N_HEADS
    dk = D // H

    stack = lambda name: jnp.stack([lp[name] for lp in params], axis=0)

    # Stack per-layer weights along a leading layer dim; pre-split the attention
    # projections per head in the wrapper (plain XLA) so the kernel never has to
    # reshape/slice the minor dims of activations.
    weights = (
        stack("ln1_g"), stack("ln1_b"),                               # (L,1,D)
        stack("wq").reshape(L, D, H, dk).transpose(0, 2, 1, 3),       # (L,H,D,dk)
        stack("bq").reshape(L, H, 1, dk),                             # (L,H,1,dk)
        stack("wk").reshape(L, D, H, dk).transpose(0, 2, 1, 3),
        stack("bk").reshape(L, H, 1, dk),
        stack("wv").reshape(L, D, H, dk).transpose(0, 2, 1, 3),
        stack("bv").reshape(L, H, 1, dk),
        stack("wo").reshape(L, H, dk, D),                             # (L,H,dk,D)
        stack("bo"),                                                  # (L,1,D)
        stack("ln2_g"), stack("ln2_b"),                               # (L,1,D)
        stack("w1"), stack("b1"),                                     # (L,D,F), (L,1,F)
        stack("w2"), stack("b2"),                                     # (L,F,D), (L,1,D)
    )

    def full_spec(w):
        zeros = (0,) * w.ndim
        # Constant block index -> fetched once, resident across all grid steps.
        return pl.BlockSpec(w.shape, lambda b, z=zeros: z)

    in_specs = [
        pl.BlockSpec((1, S, D), lambda b: (b, 0, 0)),   # x: one batch row per grid step
        pl.BlockSpec((1, 1, S), lambda b: (b, 0, 0)),   # mask for that row
    ] + [full_spec(w) for w in weights]

    kernel = functools.partial(encoder_kernel, n_layers=L, n_heads=H)

    return pl.pallas_call(
        kernel,
        out_shape=jax.ShapeDtypeStruct((B, S, D), x.dtype),
        grid_spec=pltpu.PrefetchScalarGridSpec(
            num_scalar_prefetch=0,
            grid=(B,),
            in_specs=in_specs,
            out_specs=pl.BlockSpec((1, S, D), lambda b: (b, 0, 0)),
        ),
        compiler_params=pltpu.CompilerParams(
            dimension_semantics=("parallel",)),   # B axis shards across the 2 TCs on v7x
    )(x, mask, *weights)


def init_encoder_params(key, d_model=D_MODEL, d_ff=D_FF, n_layers=N_LAYERS):
    params = []
    for _ in range(n_layers):
        key, *ks = jax.random.split(key, 7)
        s_attn = 1.0 / math.sqrt(d_model)
        s_ff = 1.0 / math.sqrt(d_model)
        params.append({
            "ln1_g": jnp.ones((1, d_model), jnp.float32),
            "ln1_b": jnp.zeros((1, d_model), jnp.float32),
            "wq": jax.random.normal(ks[0], (d_model, d_model), jnp.float32) * s_attn,
            "bq": jnp.zeros((1, d_model), jnp.float32),
            "wk": jax.random.normal(ks[1], (d_model, d_model), jnp.float32) * s_attn,
            "bk": jnp.zeros((1, d_model), jnp.float32),
            "wv": jax.random.normal(ks[2], (d_model, d_model), jnp.float32) * s_attn,
            "bv": jnp.zeros((1, d_model), jnp.float32),
            "wo": jax.random.normal(ks[3], (d_model, d_model), jnp.float32) * s_attn,
            "bo": jnp.zeros((1, d_model), jnp.float32),
            "ln2_g": jnp.ones((1, d_model), jnp.float32),
            "ln2_b": jnp.zeros((1, d_model), jnp.float32),
            "w1": jax.random.normal(ks[4], (d_model, d_ff), jnp.float32) * s_ff,
            "b1": jnp.zeros((1, d_ff), jnp.float32),
            "w2": jax.random.normal(ks[5], (d_ff, d_model), jnp.float32) * (1.0 / math.sqrt(d_ff)),
            "b2": jnp.zeros((1, d_model), jnp.float32),
        })
    return params


if __name__ == "__main__":
    B, S, D = 2, 8, D_MODEL
    key = jax.random.PRNGKey(0)
    k_x, k_p = jax.random.split(key)

    x = jax.random.normal(k_x, (B, S, D), jnp.float32)
    # mask: 1 = attend, 0 = masked-out key (last 2 positions of batch 1 masked)
    mask = jnp.ones((B, 1, S), jnp.float32)
    mask = mask.at[1, 0, S - 2:].set(0.0)

    params = init_encoder_params(k_p)

    # TODO(synk): dropout is a no-op here (inference semantics); training-mode RNG dropout not implemented.
    y = encoder_forward(x, mask, params)
    jax.block_until_ready(y)

    assert y.shape == (B, S, D) and bool(jnp.all(jnp.isfinite(y)))
    print("KERNEL_OK")
</pallas_src>

<mosaic_0001>
module attributes {stable_mosaic.version = 11 : i64} {
  func.func @encoder_kernel(%arg0: i32, %arg1: memref<1x8x32xf32, #tpu.memory_space<vmem>>, %arg2: memref<1x1x8xf32, #tpu.memory_space<vmem>>, %arg3: memref<2x1x32xf32, #tpu.memory_space<vmem>>, %arg4: memref<2x1x32xf32, #tpu.memory_space<vmem>>, %arg5: memref<2x4x32x8xf32, #tpu.memory_space<vmem>>, %arg6: memref<2x4x1x8xf32, #tpu.memory_space<vmem>>, %arg7: memref<2x4x32x8xf32, #tpu.memory_space<vmem>>, %arg8: memref<2x4x1x8xf32, #tpu.memory_space<vmem>>, %arg9: memref<2x4x32x8xf32, #tpu.memory_space<vmem>>, %arg10: memref<2x4x1x8xf32, #tpu.memory_space<vmem>>, %arg11: memref<2x4x8x32xf32, #tpu.memory_space<vmem>>, %arg12: memref<2x1x32xf32, #tpu.memory_space<vmem>>, %arg13: memref<2x1x32xf32, #tpu.memory_space<vmem>>, %arg14: memref<2x1x32xf32, #tpu.memory_space<vmem>>, %arg15: memref<2x32x64xf32, #tpu.memory_space<vmem>>, %arg16: memref<2x1x64xf32, #tpu.memory_space<vmem>>, %arg17: memref<2x64x32xf32, #tpu.memory_space<vmem>>, %arg18: memref<2x1x32xf32, #tpu.memory_space<vmem>>, %arg19: memref<1x8x32xf32, #tpu.memory_space<vmem>>) attributes {dimension_semantics = [#tpu.dimension_semantics<parallel>], iteration_bounds = array<i64: 2>, scalar_prefetch = 0 : i64, scratch_operands = 0 : i64, tpu.core_type = #tpu.core_type<tc>, window_params = [{transform_indices = @transform_0, window_bounds = array<i64: 1, 8, 32>}, {transform_indices = @transform_1, window_bounds = array<i64: 1, 1, 8>}, {pipeline_mode = #tpu.pipeline_mode<synchronous>, transform_indices = @transform_2, window_bounds = array<i64: 2, 1, 32>}, {pipeline_mode = #tpu.pipeline_mode<synchronous>, transform_indices = @transform_3, window_bounds = array<i64: 2, 1, 32>}, {pipeline_mode = #tpu.pipeline_mode<synchronous>, transform_indices = @transform_4, window_bounds = array<i64: 2, 4, 32, 8>}, {pipeline_mode = #tpu.pipeline_mode<synchronous>, transform_indices = @transform_5, window_bounds = array<i64: 2, 4, 1, 8>}, {pipeline_mode = #tpu.pipeline_mode<synchronous>, transform_indices = @transform_6, window_bounds = array<i64: 2, 4, 32, 8>}, {pipeline_mode = #tpu.pipeline_mode<synchronous>, transform_indices = @transform_7, window_bounds = array<i64: 2, 4, 1, 8>}, {pipeline_mode = #tpu.pipeline_mode<synchronous>, transform_indices = @transform_8, window_bounds = array<i64: 2, 4, 32, 8>}, {pipeline_mode = #tpu.pipeline_mode<synchronous>, transform_indices = @transform_9, window_bounds = array<i64: 2, 4, 1, 8>}, {pipeline_mode = #tpu.pipeline_mode<synchronous>, transform_indices = @transform_10, window_bounds = array<i64: 2, 4, 8, 32>}, {pipeline_mode = #tpu.pipeline_mode<synchronous>, transform_indices = @transform_11, window_bounds = array<i64: 2, 1, 32>}, {pipeline_mode = #tpu.pipeline_mode<synchronous>, transform_indices = @transform_12, window_bounds = array<i64: 2, 1, 32>}, {pipeline_mode = #tpu.pipeline_mode<synchronous>, transform_indices = @transform_13, window_bounds = array<i64: 2, 1, 32>}, {pipeline_mode = #tpu.pipeline_mode<synchronous>, transform_indices = @transform_14, window_bounds = array<i64: 2, 32, 64>}, {pipeline_mode = #tpu.pipeline_mode<synchronous>, transform_indices = @transform_15, window_bounds = array<i64: 2, 1, 64>}, {pipeline_mode = #tpu.pipeline_mode<synchronous>, transform_indices = @transform_16, window_bounds = array<i64: 2, 64, 32>}, {pipeline_mode = #tpu.pipeline_mode<synchronous>, transform_indices = @transform_17, window_bounds = array<i64: 2, 1, 32>}, {transform_indices = @transform_18, window_bounds = array<i64: 1, 8, 32>}]} {
    %c0 = arith.constant 0 : index
    %c0_0 = arith.constant 0 : index
    %c0_1 = arith.constant 0 : index
    %0 = vector.load %arg1[%c0, %c0_0, %c0_1] : memref<1x8x32xf32, #tpu.memory_space<vmem>>, vector<1x8x32xf32>
    %1 = vector.shape_cast %0 : vector<1x8x32xf32> to vector<8x32xf32>
    %c0_2 = arith.constant 0 : index
    %c0_3 = arith.constant 0 : index
    %c0_4 = arith.constant 0 : index
    %2 = vector.load %arg2[%c0_2, %c0_3, %c0_4] : memref<1x1x8xf32, #tpu.memory_space<vmem>>, vector<1x1x8xf32>
    %3 = vector.shape_cast %2 : vector<1x1x8xf32> to vector<1x8xf32>
    %cst = arith.constant 0.000000e+00 : f32
    %4 = vector.broadcast %cst : f32 to vector<1x8xf32>
    %5 = arith.cmpf oeq, %3, %4 : vector<1x8xf32>
    %c0_5 = arith.constant 0 : index
    %c0_6 = arith.constant 0 : index
    %c0_7 = arith.constant 0 : index
    %6 = vector.load %arg3[%c0_5, %c0_6, %c0_7] : memref<2x1x32xf32, #tpu.memory_space<vmem>>, vector<1x1x32xf32>
    %7 = vector.shape_cast %6 : vector<1x1x32xf32> to vector<1x32xf32>
    %c0_8 = arith.constant 0 : index
    %c0_9 = arith.constant 0 : index
    %c0_10 = arith.constant 0 : index
    %8 = vector.load %arg4[%c0_8, %c0_9, %c0_10] : memref<2x1x32xf32, #tpu.memory_space<vmem>>, vector<1x1x32xf32>
    %9 = vector.shape_cast %8 : vector<1x1x32xf32> to vector<1x32xf32>
    %cst_11 = arith.constant dense<0.000000e+00> : vector<8xf32>
    %10 = vector.multi_reduction <add>, %1, %cst_11 [1] : vector<8x32xf32> to vector<8xf32>
    %11 = vector.shape_cast %10 : vector<8xf32> to vector<8x1xf32>
    %cst_12 = arith.constant 3.200000e+01 : f32
    %12 = vector.broadcast %cst_12 : f32 to vector<8x1xf32>
    %13 = arith.divf %11, %12 : vector<8x1xf32>
    %14 = vector.broadcast %13 : vector<8x1xf32> to vector<8x32xf32>
    %15 = arith.subf %1, %14 : vector<8x32xf32>
    %16 = arith.mulf %15, %15 : vector<8x32xf32>
    %cst_13 = arith.constant dense<0.000000e+00> : vector<8xf32>
    %17 = vector.multi_reduction <add>, %16, %cst_13 [1] : vector<8x32xf32> to vector<8xf32>
    %18 = vector.shape_cast %17 : vector<8xf32> to vector<8x1xf32>
    %cst_14 = arith.constant 0.0322580636 : f32
    %19 = vector.broadcast %cst_14 : f32 to vector<8x1xf32>
    %20 = arith.mulf %18, %19 : vector<8x1xf32>
    %21 = math.sqrt %20 : vector<8x1xf32>
    %cst_15 = arith.constant 9.99999997E-7 : f32
    %22 = vector.broadcast %cst_15 : f32 to vector<8x1xf32>
    %23 = arith.addf %21, %22 : vector<8x1xf32>
    %24 = tpu.reciprocal %23 {approx = true} : vector<8x1xf32> -> vector<8x1xf32>
    %25 = vector.broadcast %13 : vector<8x1xf32> to vector<8x32xf32>
    %26 = arith.subf %1, %25 : vector<8x32xf32>
    %27 = vector.broadcast %7 : vector<1x32xf32> to vector<8x32xf32>
    %28 = arith.mulf %27, %26 : vector<8x32xf32>
    %29 = vector.broadcast %24 : vector<8x1xf32> to vector<8x32xf32>
    %30 = arith.mulf %28, %29 : vector<8x32xf32>
    %31 = vector.broadcast %9 : vector<1x32xf32> to vector<8x32xf32>
    %32 = arith.addf %30, %31 : vector<8x32xf32>
    %33 = vector.shape_cast %32 : vector<8x32xf32> to vector<1x8x32xf32>
    %34 = vector.shape_cast %33 : vector<1x8x32xf32> to vector<1x8x32xf32>
    %35 = vector.broadcast %34 : vector<1x8x32xf32> to vector<4x8x32xf32>
    %c0_16 = arith.constant 0 : index
    %c0_17 = arith.constant 0 : index
    %c0_18 = arith.constant 0 : index
    %c0_19 = arith.constant 0 : index
    %36 = vector.load %arg5[%c0_16, %c0_17, %c0_18, %c0_19] : memref<2x4x32x8xf32, #tpu.memory_space<vmem>>, vector<1x4x32x8xf32>
    %37 = vector.shape_cast %36 : vector<1x4x32x8xf32> to vector<4x32x8xf32>
    "tpu.trace_start"() <{level = 10 : i32, message = "hsd,hdk->hsk"}> : () -> ()
    %cst_20 = arith.constant dense<0.000000e+00> : vector<4x8x8xf32>
    %38 = tpu.matmul %35, %37, %cst_20 {dimension_numbers = #tpu.dot_dimension_numbers<[2], [1], [1], [2], [0, 0, 0, 1, 1, 2], [0], [0]>} : vector<4x8x32xf32>, vector<4x32x8xf32>, vector<4x8x8xf32> -> vector<4x8x8xf32>
    "tpu.trace_stop"() : () -> ()
    %c0_21 = arith.constant 0 : index
    %c0_22 = arith.constant 0 : index
    %c0_23 = arith.constant 0 : index
    %c0_24 = arith.constant 0 : index
    %39 = vector.load %arg6[%c0_21, %c0_22, %c0_23, %c0_24] : memref<2x4x1x8xf32, #tpu.memory_space<vmem>>, vector<1x4x1x8xf32>
    %40 = vector.shape_cast %39 : vector<1x4x1x8xf32> to vector<4x1x8xf32>
    %41 = vector.broadcast %40 : vector<4x1x8xf32> to vector<4x8x8xf32>
    %42 = arith.addf %38, %41 : vector<4x8x8xf32>
    %c0_25 = arith.constant 0 : index
    %c0_26 = arith.constant 0 : index
    %c0_27 = arith.constant 0 : index
    %c0_28 = arith.constant 0 : index
    %43 = vector.load %arg7[%c0_25, %c0_26, %c0_27, %c0_28] : memref<2x4x32x8xf32, #tpu.memory_space<vmem>>, vector<1x4x32x8xf32>
    %44 = vector.shape_cast %43 : vector<1x4x32x8xf32> to vector<4x32x8xf32>
    "tpu.trace_start"() <{level = 10 : i32, message = "hsd,hdk->hsk"}> : () -> ()
    %cst_29 = arith.constant dense<0.000000e+00> : vector<4x8x8xf32>
    %45 = tpu.matmul %35, %44, %cst_29 {dimension_numbers = #tpu.dot_dimension_numbers<[2], [1], [1], [2], [0, 0, 0, 1, 1, 2], [0], [0]>} : vector<4x8x32xf32>, vector<4x32x8xf32>, vector<4x8x8xf32> -> vector<4x8x8xf32>
    "tpu.trace_stop"() : () -> ()
    %c0_30 = arith.constant 0 : index
    %c0_31 = arith.constant 0 : index
    %c0_32 = arith.constant 0 : index
    %c0_33 = arith.constant 0 : index
    %46 = vector.load %arg8[%c0_30, %c0_31, %c0_32, %c0_33] : memref<2x4x1x8xf32, #tpu.memory_space<vmem>>, vector<1x4x1x8xf32>
    %47 = vector.shape_cast %46 : vector<1x4x1x8xf32> to vector<4x1x8xf32>
    %48 = vector.broadcast %47 : vector<4x1x8xf32> to vector<4x8x8xf32>
    %49 = arith.addf %45, %48 : vector<4x8x8xf32>
    %c0_34 = arith.constant 0 : index
    %c0_35 = arith.constant 0 : index
    %c0_36 = arith.constant 0 : index
    %c0_37 = arith.constant 0 : index
    %50 = vector.load %arg9[%c0_34, %c0_35, %c0_36, %c0_37] : memref<2x4x32x8xf32, #tpu.memory_space<vmem>>, vector<1x4x32x8xf32>
    %51 = vector.shape_cast %50 : vector<1x4x32x8xf32> to vector<4x32x8xf32>
    "tpu.trace_start"() <{level = 10 : i32, message = "hsd,hdk->hsk"}> : () -> ()
    %cst_38 = arith.constant dense<0.000000e+00> : vector<4x8x8xf32>
    %52 = tpu.matmul %35, %51, %cst_38 {dimension_numbers = #tpu.dot_dimension_numbers<[2], [1], [1], [2], [0, 0, 0, 1, 1, 2], [0], [0]>} : vector<4x8x32xf32>, vector<4x32x8xf32>, vector<4x8x8xf32> -> vector<4x8x8xf32>
    "tpu.trace_stop"() : () -> ()
    %c0_39 = arith.constant 0 : index
    %c0_40 = arith.constant 0 : index
    %c0_41 = arith.constant 0 : index
    %c0_42 = arith.constant 0 : index
    %53 = vector.load %arg10[%c0_39, %c0_40, %c0_41, %c0_42] : memref<2x4x1x8xf32, #tpu.memory_space<vmem>>, vector<1x4x1x8xf32>
    %54 = vector.shape_cast %53 : vector<1x4x1x8xf32> to vector<4x1x8xf32>
    %55 = vector.broadcast %54 : vector<4x1x8xf32> to vector<4x8x8xf32>
    %56 = arith.addf %52, %55 : vector<4x8x8xf32>
    "tpu.trace_start"() <{level = 10 : i32, message = "hqd,hkd->hqk"}> : () -> ()
    %cst_43 = arith.constant dense<0.000000e+00> : vector<4x8x8xf32>
    %57 = tpu.matmul %42, %49, %cst_43 {dimension_numbers = #tpu.dot_dimension_numbers<[2], [2], [1], [1], [0, 0, 0, 1, 1, 1], [0], [0]>} : vector<4x8x8xf32>, vector<4x8x8xf32>, vector<4x8x8xf32> -> vector<4x8x8xf32>
    "tpu.trace_stop"() : () -> ()
    %cst_44 = arith.constant 0.353553385 : f32
    %58 = vector.broadcast %cst_44 : f32 to vector<4x8x8xf32>
    %59 = arith.mulf %57, %58 : vector<4x8x8xf32>
    %cst_45 = arith.constant -1.000000e+09 : f32
    %60 = vector.shape_cast %5 : vector<1x8xi1> to vector<1x1x8xi1>
    %61 = vector.broadcast %60 : vector<1x1x8xi1> to vector<4x8x8xi1>
    %62 = vector.broadcast %cst_45 : f32 to vector<4x8x8xf32>
    %63 = arith.select %61, %62, %59 : vector<4x8x8xi1>, vector<4x8x8xf32>
    %cst_46 = arith.constant dense<0xFF800000> : vector<4x8xf32>
    %64 = vector.multi_reduction <maximumf>, %63, %cst_46 [2] : vector<4x8x8xf32> to vector<4x8xf32>
    %65 = vector.shape_cast %64 : vector<4x8xf32> to vector<4x8x1xf32>
    %66 = vector.broadcast %65 : vector<4x8x1xf32> to vector<4x8x8xf32>
    %67 = arith.subf %63, %66 : vector<4x8x8xf32>
    %68 = math.exp %67 : vector<4x8x8xf32>
    %cst_47 = arith.constant dense<0.000000e+00> : vector<4x8xf32>
    %69 = vector.multi_reduction <add>, %68, %cst_47 [2] : vector<4x8x8xf32> to vector<4x8xf32>
    %70 = vector.shape_cast %69 : vector<4x8xf32> to vector<4x8x1xf32>
    %71 = tpu.reciprocal %70 {approx = true} : vector<4x8x1xf32> -> vector<4x8x1xf32>
    %72 = vector.broadcast %71 : vector<4x8x1xf32> to vector<4x8x8xf32>
    %73 = arith.mulf %68, %72 : vector<4x8x8xf32>
    "tpu.trace_start"() <{level = 10 : i32, message = "hqk,hkd->hqd"}> : () -> ()
    %cst_48 = arith.constant dense<0.000000e+00> : vector<4x8x8xf32>
    %74 = tpu.matmul %73, %56, %cst_48 {dimension_numbers = #tpu.dot_dimension_numbers<[2], [1], [1], [2], [0, 0, 0, 1, 1, 2], [0], [0]>} : vector<4x8x8xf32>, vector<4x8x8xf32>, vector<4x8x8xf32> -> vector<4x8x8xf32>
    "tpu.trace_stop"() : () -> ()
    %c0_49 = arith.constant 0 : index
    %c0_50 = arith.constant 0 : index
    %c0_51 = arith.constant 0 : index
    %c0_52 = arith.constant 0 : index
    %75 = vector.load %arg11[%c0_49, %c0_50, %c0_51, %c0_52] : memref<2x4x8x32xf32, #tpu.memory_space<vmem>>, vector<1x4x8x32xf32>
    %76 = vector.shape_cast %75 : vector<1x4x8x32xf32> to vector<4x8x32xf32>
    "tpu.trace_start"() <{level = 10 : i32, message = "hsd,hdo->hso"}> : () -> ()
    %cst_53 = arith.constant dense<0.000000e+00> : vector<4x8x32xf32>
    %77 = tpu.matmul %74, %76, %cst_53 {dimension_numbers = #tpu.dot_dimension_numbers<[2], [1], [1], [2], [0, 0, 0, 1, 1, 2], [0], [0]>} : vector<4x8x8xf32>, vector<4x8x32xf32>, vector<4x8x32xf32> -> vector<4x8x32xf32>
    "tpu.trace_stop"() : () -> ()
    %cst_54 = arith.constant dense<0.000000e+00> : vector<8x32xf32>
    %78 = vector.multi_reduction <add>, %77, %cst_54 [0] : vector<4x8x32xf32> to vector<8x32xf32>
    %79 = arith.addf %1, %78 : vector<8x32xf32>
    %c0_55 = arith.constant 0 : index
    %c0_56 = arith.constant 0 : index
    %c0_57 = arith.constant 0 : index
    %80 = vector.load %arg12[%c0_55, %c0_56, %c0_57] : memref<2x1x32xf32, #tpu.memory_space<vmem>>, vector<1x1x32xf32>
    %81 = vector.shape_cast %80 : vector<1x1x32xf32> to vector<1x32xf32>
    %82 = vector.broadcast %81 : vector<1x32xf32> to vector<8x32xf32>
    %83 = arith.addf %79, %82 : vector<8x32xf32>
    %c0_58 = arith.constant 0 : index
    %c0_59 = arith.constant 0 : index
    %c0_60 = arith.constant 0 : index
    %84 = vector.load %arg13[%c0_58, %c0_59, %c0_60] : memref<2x1x32xf32, #tpu.memory_space<vmem>>, vector<1x1x32xf32>
    %85 = vector.shape_cast %84 : vector<1x1x32xf32> to vector<1x32xf32>
    %c0_61 = arith.constant 0 : index
    %c0_62 = arith.constant 0 : index
    %c0_63 = arith.constant 0 : index
    %86 = vector.load %arg14[%c0_61, %c0_62, %c0_63] : memref<2x1x32xf32, #tpu.memory_space<vmem>>, vector<1x1x32xf32>
    %87 = vector.shape_cast %86 : vector<1x1x32xf32> to vector<1x32xf32>
    %cst_64 = arith.constant dense<0.000000e+00> : vector<8xf32>
    %88 = vector.multi_reduction <add>, %83, %cst_64 [1] : vector<8x32xf32> to vector<8xf32>
    %89 = vector.shape_cast %88 : vector<8xf32> to vector<8x1xf32>
    %cst_65 = arith.constant 3.200000e+01 : f32
    %90 = vector.broadcast %cst_65 : f32 to vector<8x1xf32>
    %91 = arith.divf %89, %90 : vector<8x1xf32>
    %92 = vector.broadcast %91 : vector<8x1xf32> to vector<8x32xf32>
    %93 = arith.subf %83, %92 : vector<8x32xf32>
    %94 = arith.mulf %93, %93 : vector<8x32xf32>
    %cst_66 = arith.constant dense<0.000000e+00> : vector<8xf32>
    %95 = vector.multi_reduction <add>, %94, %cst_66 [1] : vector<8x32xf32> to vector<8xf32>
    %96 = vector.shape_cast %95 : vector<8xf32> to vector<8x1xf32>
    %cst_67 = arith.constant 0.0322580636 : f32
    %97 = vector.broadcast %cst_67 : f32 to vector<8x1xf32>
    %98 = arith.mulf %96, %97 : vector<8x1xf32>
    %99 = math.sqrt %98 : vector<8x1xf32>
    %cst_68 = arith.constant 9.99999997E-7 : f32
    %100 = vector.broadcast %cst_68 : f32 to vector<8x1xf32>
    %101 = arith.addf %99, %100 : vector<8x1xf32>
    %102 = tpu.reciprocal %101 {approx = true} : vector<8x1xf32> -> vector<8x1xf32>
    %103 = vector.broadcast %91 : vector<8x1xf32> to vector<8x32xf32>
    %104 = arith.subf %83, %103 : vector<8x32xf32>
    %105 = vector.broadcast %85 : vector<1x32xf32> to vector<8x32xf32>
    %106 = arith.mulf %105, %104 : vector<8x32xf32>
    %107 = vector.broadcast %102 : vector<8x1xf32> to vector<8x32xf32>
    %108 = arith.mulf %106, %107 : vector<8x32xf32>
    %109 = vector.broadcast %87 : vector<1x32xf32> to vector<8x32xf32>
    %110 = arith.addf %108, %109 : vector<8x32xf32>
    %c0_69 = arith.constant 0 : index
    %c0_70 = arith.constant 0 : index
    %c0_71 = arith.constant 0 : index
    %111 = vector.load %arg15[%c0_69, %c0_70, %c0_71] : memref<2x32x64xf32, #tpu.memory_space<vmem>>, vector<1x32x64xf32>
    %112 = vector.shape_cast %111 : vector<1x32x64xf32> to vector<32x64xf32>
    %cst_72 = arith.constant dense<0.000000e+00> : vector<8x64xf32>
    %113 = tpu.matmul %110, %112, %cst_72 {dimension_numbers = #tpu.dot_dimension_numbers<[1], [0], [0], [1], [0, 0, 1, 1], [], []>} : vector<8x32xf32>, vector<32x64xf32>, vector<8x64xf32> -> vector<8x64xf32>
    %c0_73 = arith.constant 0 : index
    %c0_74 = arith.constant 0 : index
    %c0_75 = arith.constant 0 : index
    %114 = vector.load %arg16[%c0_73, %c0_74, %c0_75] : memref<2x1x64xf32, #tpu.memory_space<vmem>>, vector<1x1x64xf32>
    %115 = vector.shape_cast %114 : vector<1x1x64xf32> to vector<1x64xf32>
    %116 = vector.broadcast %115 : vector<1x64xf32> to vector<8x64xf32>
    %117 = arith.addf %113, %116 : vector<8x64xf32>
    %cst_76 = arith.constant 0.000000e+00 : f32
    %118 = vector.broadcast %cst_76 : f32 to vector<8x64xf32>
    %119 = arith.maximumf %117, %118 : vector<8x64xf32>
    %c0_77 = arith.constant 0 : index
    %c0_78 = arith.constant 0 : index
    %c0_79 = arith.constant 0 : index
    %120 = vector.load %arg17[%c0_77, %c0_78, %c0_79] : memref<2x64x32xf32, #tpu.memory_space<vmem>>, vector<1x64x32xf32>
    %121 = vector.shape_cast %120 : vector<1x64x32xf32> to vector<64x32xf32>
    %cst_80 = arith.constant dense<0.000000e+00> : vector<8x32xf32>
    %122 = tpu.matmul %119, %121, %cst_80 {dimension_numbers = #tpu.dot_dimension_numbers<[1], [0], [0], [1], [0, 0, 1, 1], [], []>} : vector<8x64xf32>, vector<64x32xf32>, vector<8x32xf32> -> vector<8x32xf32>
    %123 = arith.addf %83, %122 : vector<8x32xf32>
    %c0_81 = arith.constant 0 : index
    %c0_82 = arith.constant 0 : index
    %c0_83 = arith.constant 0 : index
    %124 = vector.load %arg18[%c0_81, %c0_82, %c0_83] : memref<2x1x32xf32, #tpu.memory_space<vmem>>, vector<1x1x32xf32>
    %125 = vector.shape_cast %124 : vector<1x1x32xf32> to vector<1x32xf32>
    %126 = vector.broadcast %125 : vector<1x32xf32> to vector<8x32xf32>
    %127 = arith.addf %123, %126 : vector<8x32xf32>
    %c1 = arith.constant 1 : index
    %c0_84 = arith.constant 0 : index
    %c0_85 = arith.constant 0 : index
    %128 = vector.load %arg3[%c1, %c0_84, %c0_85] : memref<2x1x32xf32, #tpu.memory_space<vmem>>, vector<1x1x32xf32>
    %129 = vector.shape_cast %128 : vector<1x1x32xf32> to vector<1x32xf32>
    %c1_86 = arith.constant 1 : index
    %c0_87 = arith.constant 0 : index
    %c0_88 = arith.constant 0 : index
    %130 = vector.load %arg4[%c1_86, %c0_87, %c0_88] : memref<2x1x32xf32, #tpu.memory_space<vmem>>, vector<1x1x32xf32>
    %131 = vector.shape_cast %130 : vector<1x1x32xf32> to vector<1x32xf32>
    %cst_89 = arith.constant dense<0.000000e+00> : vector<8xf32>
    %132 = vector.multi_reduction <add>, %127, %cst_89 [1] : vector<8x32xf32> to vector<8xf32>
    %133 = vector.shape_cast %132 : vector<8xf32> to vector<8x1xf32>
    %cst_90 = arith.constant 3.200000e+01 : f32
    %134 = vector.broadcast %cst_90 : f32 to vector<8x1xf32>
    %135 = arith.divf %133, %134 : vector<8x1xf32>
    %136 = vector.broadcast %135 : vector<8x1xf32> to vector<8x32xf32>
    %137 = arith.subf %127, %136 : vector<8x32xf32>
    %138 = arith.mulf %137, %137 : vector<8x32xf32>
    %cst_91 = arith.constant dense<0.000000e+00> : vector<8xf32>
    %139 = vector.multi_reduction <add>, %138, %cst_91 [1] : vector<8x32xf32> to vector<8xf32>
    %140 = vector.shape_cast %139 : vector<8xf32> to vector<8x1xf32>
    %cst_92 = arith.constant 0.0322580636 : f32
    %141 = vector.broadcast %cst_92 : f32 to vector<8x1xf32>
    %142 = arith.mulf %140, %141 : vector<8x1xf32>
    %143 = math.sqrt %142 : vector<8x1xf32>
    %cst_93 = arith.constant 9.99999997E-7 : f32
    %144 = vector.broadcast %cst_93 : f32 to vector<8x1xf32>
    %145 = arith.addf %143, %144 : vector<8x1xf32>
    %146 = tpu.reciprocal %145 {approx = true} : vector<8x1xf32> -> vector<8x1xf32>
    %147 = vector.broadcast %135 : vector<8x1xf32> to vector<8x32xf32>
    %148 = arith.subf %127, %147 : vector<8x32xf32>
    %149 = vector.broadcast %129 : vector<1x32xf32> to vector<8x32xf32>
    %150 = arith.mulf %149, %148 : vector<8x32xf32>
    %151 = vector.broadcast %146 : vector<8x1xf32> to vector<8x32xf32>
    %152 = arith.mulf %150, %151 : vector<8x32xf32>
    %153 = vector.broadcast %131 : vector<1x32xf32> to vector<8x32xf32>
    %154 = arith.addf %152, %153 : vector<8x32xf32>
    %155 = vector.shape_cast %154 : vector<8x32xf32> to vector<1x8x32xf32>
    %156 = vector.shape_cast %155 : vector<1x8x32xf32> to vector<1x8x32xf32>
    %157 = vector.broadcast %156 : vector<1x8x32xf32> to vector<4x8x32xf32>
    %c1_94 = arith.constant 1 : index
    %c0_95 = arith.constant 0 : index
    %c0_96 = arith.constant 0 : index
    %c0_97 = arith.constant 0 : index
    %158 = vector.load %arg5[%c1_94, %c0_95, %c0_96, %c0_97] : memref<2x4x32x8xf32, #tpu.memory_space<vmem>>, vector<1x4x32x8xf32>
    %159 = vector.shape_cast %158 : vector<1x4x32x8xf32> to vector<4x32x8xf32>
    "tpu.trace_start"() <{level = 10 : i32, message = "hsd,hdk->hsk"}> : () -> ()
    %cst_98 = arith.constant dense<0.000000e+00> : vector<4x8x8xf32>
    %160 = tpu.matmul %157, %159, %cst_98 {dimension_numbers = #tpu.dot_dimension_numbers<[2], [1], [1], [2], [0, 0, 0, 1, 1, 2], [0], [0]>} : vector<4x8x32xf32>, vector<4x32x8xf32>, vector<4x8x8xf32> -> vector<4x8x8xf32>
    "tpu.trace_stop"() : () -> ()
    %c1_99 = arith.constant 1 : index
    %c0_100 = arith.constant 0 : index
    %c0_101 = arith.constant 0 : index
    %c0_102 = arith.constant 0 : index
    %161 = vector.load %arg6[%c1_99, %c0_100, %c0_101, %c0_102] : memref<2x4x1x8xf32, #tpu.memory_space<vmem>>, vector<1x4x1x8xf32>
    %162 = vector.shape_cast %161 : vector<1x4x1x8xf32> to vector<4x1x8xf32>
    %163 = vector.broadcast %162 : vector<4x1x8xf32> to vector<4x8x8xf32>
    %164 = arith.addf %160, %163 : vector<4x8x8xf32>
    %c1_103 = arith.constant 1 : index
    %c0_104 = arith.constant 0 : index
    %c0_105 = arith.constant 0 : index
    %c0_106 = arith.constant 0 : index
    %165 = vector.load %arg7[%c1_103, %c0_104, %c0_105, %c0_106] : memref<2x4x32x8xf32, #tpu.memory_space<vmem>>, vector<1x4x32x8xf32>
    %166 = vector.shape_cast %165 : vector<1x4x32x8xf32> to vector<4x32x8xf32>
    "tpu.trace_start"() <{level = 10 : i32, message = "hsd,hdk->hsk"}> : () -> ()
    %cst_107 = arith.constant dense<0.000000e+00> : vector<4x8x8xf32>
    %167 = tpu.matmul %157, %166, %cst_107 {dimension_numbers = #tpu.dot_dimension_numbers<[2], [1], [1], [2], [0, 0, 0, 1, 1, 2], [0], [0]>} : vector<4x8x32xf32>, vector<4x32x8xf32>, vector<4x8x8xf32> -> vector<4x8x8xf32>
    "tpu.trace_stop"() : () -> ()
    %c1_108 = arith.constant 1 : index
    %c0_109 = arith.constant 0 : index
    %c0_110 = arith.constant 0 : index
    %c0_111 = arith.constant 0 : index
    %168 = vector.load %arg8[%c1_108, %c0_109, %c0_110, %c0_111] : memref<2x4x1x8xf32, #tpu.memory_space<vmem>>, vector<1x4x1x8xf32>
    %169 = vector.shape_cast %168 : vector<1x4x1x8xf32> to vector<4x1x8xf32>
    %170 = vector.broadcast %169 : vector<4x1x8xf32> to vector<4x8x8xf32>
    %171 = arith.addf %167, %170 : vector<4x8x8xf32>
    %c1_112 = arith.constant 1 : index
    %c0_113 = arith.constant 0 : index
    %c0_114 = arith.constant 0 : index
    %c0_115 = arith.constant 0 : index
    %172 = vector.load %arg9[%c1_112, %c0_113, %c0_114, %c0_115] : memref<2x4x32x8xf32, #tpu.memory_space<vmem>>, vector<1x4x32x8xf32>
    %173 = vector.shape_cast %172 : vector<1x4x32x8xf32> to vector<4x32x8xf32>
    "tpu.trace_start"() <{level = 10 : i32, message = "hsd,hdk->hsk"}> : () -> ()
    %cst_116 = arith.constant dense<0.000000e+00> : vector<4x8x8xf32>
    %174 = tpu.matmul %157, %173, %cst_116 {dimension_numbers = #tpu.dot_dimension_numbers<[2], [1], [1], [2], [0, 0, 0, 1, 1, 2], [0], [0]>} : vector<4x8x32xf32>, vector<4x32x8xf32>, vector<4x8x8xf32> -> vector<4x8x8xf32>
    "tpu.trace_stop"() : () -> ()
    %c1_117 = arith.constant 1 : index
    %c0_118 = arith.constant 0 : index
    %c0_119 = arith.constant 0 : index
    %c0_120 = arith.constant 0 : index
    %175 = vector.load %arg10[%c1_117, %c0_118, %c0_119, %c0_120] : memref<2x4x1x8xf32, #tpu.memory_space<vmem>>, vector<1x4x1x8xf32>
    %176 = vector.shape_cast %175 : vector<1x4x1x8xf32> to vector<4x1x8xf32>
    %177 = vector.broadcast %176 : vector<4x1x8xf32> to vector<4x8x8xf32>
    %178 = arith.addf %174, %177 : vector<4x8x8xf32>
    "tpu.trace_start"() <{level = 10 : i32, message = "hqd,hkd->hqk"}> : () -> ()
    %cst_121 = arith.constant dense<0.000000e+00> : vector<4x8x8xf32>
    %179 = tpu.matmul %164, %171, %cst_121 {dimension_numbers = #tpu.dot_dimension_numbers<[2], [2], [1], [1], [0, 0, 0, 1, 1, 1], [0], [0]>} : vector<4x8x8xf32>, vector<4x8x8xf32>, vector<4x8x8xf32> -> vector<4x8x8xf32>
    "tpu.trace_stop"() : () -> ()
    %cst_122 = arith.constant 0.353553385 : f32
    %180 = vector.broadcast %cst_122 : f32 to vector<4x8x8xf32>
    %181 = arith.mulf %179, %180 : vector<4x8x8xf32>
    %cst_123 = arith.constant -1.000000e+09 : f32
    %182 = vector.shape_cast %5 : vector<1x8xi1> to vector<1x1x8xi1>
    %183 = vector.broadcast %182 : vector<1x1x8xi1> to vector<4x8x8xi1>
    %184 = vector.broadcast %cst_123 : f32 to vector<4x8x8xf32>
    %185 = arith.select %183, %184, %181 : vector<4x8x8xi1>, vector<4x8x8xf32>
    %cst_124 = arith.constant dense<0xFF800000> : vector<4x8xf32>
    %186 = vector.multi_reduction <maximumf>, %185, %cst_124 [2] : vector<4x8x8xf32> to vector<4x8xf32>
    %187 = vector.shape_cast %186 : vector<4x8xf32> to vector<4x8x1xf32>
    %188 = vector.broadcast %187 : vector<4x8x1xf32> to vector<4x8x8xf32>
    %189 = arith.subf %185, %188 : vector<4x8x8xf32>
    %190 = math.exp %189 : vector<4x8x8xf32>
    %cst_125 = arith.constant dense<0.000000e+00> : vector<4x8xf32>
    %191 = vector.multi_reduction <add>, %190, %cst_125 [2] : vector<4x8x8xf32> to vector<4x8xf32>
    %192 = vector.shape_cast %191 : vector<4x8xf32> to vector<4x8x1xf32>
    %193 = tpu.reciprocal %192 {approx = true} : vector<4x8x1xf32> -> vector<4x8x1xf32>
    %194 = vector.broadcast %193 : vector<4x8x1xf32> to vector<4x8x8xf32>
    %195 = arith.mulf %190, %194 : vector<4x8x8xf32>
    "tpu.trace_start"() <{level = 10 : i32, message = "hqk,hkd->hqd"}> : () -> ()
    %cst_126 = arith.constant dense<0.000000e+00> : vector<4x8x8xf32>
    %196 = tpu.matmul %195, %178, %cst_126 {dimension_numbers = #tpu.dot_dimension_numbers<[2], [1], [1], [2], [0, 0, 0, 1, 1, 2], [0], [0]>} : vector<4x8x8xf32>, vector<4x8x8xf32>, vector<4x8x8xf32> -> vector<4x8x8xf32>
    "tpu.trace_stop"() : () -> ()
    %c1_127 = arith.constant 1 : index
    %c0_128 = arith.constant 0 : index
    %c0_129 = arith.constant 0 : index
    %c0_130 = arith.constant 0 : index
    %197 = vector.load %arg11[%c1_127, %c0_128, %c0_129, %c0_130] : memref<2x4x8x32xf32, #tpu.memory_space<vmem>>, vector<1x4x8x32xf32>
    %198 = vector.shape_cast %197 : vector<1x4x8x32xf32> to vector<4x8x32xf32>
    "tpu.trace_start"() <{level = 10 : i32, message = "hsd,hdo->hso"}> : () -> ()
    %cst_131 = arith.constant dense<0.000000e+00> : vector<4x8x32xf32>
    %199 = tpu.matmul %196, %198, %cst_131 {dimension_numbers = #tpu.dot_dimension_numbers<[2], [1], [1], [2], [0, 0, 0, 1, 1, 2], [0], [0]>} : vector<4x8x8xf32>, vector<4x8x32xf32>, vector<4x8x32xf32> -> vector<4x8x32xf32>
    "tpu.trace_stop"() : () -> ()
    %cst_132 = arith.constant dense<0.000000e+00> : vector<8x32xf32>
    %200 = vector.multi_reduction <add>, %199, %cst_132 [0] : vector<4x8x32xf32> to vector<8x32xf32>
    %201 = arith.addf %127, %200 : vector<8x32xf32>
    %c1_133 = arith.constant 1 : index
    %c0_134 = arith.constant 0 : index
    %c0_135 = arith.constant 0 : index
    %202 = vector.load %arg12[%c1_133, %c0_134, %c0_135] : memref<2x1x32xf32, #tpu.memory_space<vmem>>, vector<1x1x32xf32>
    %203 = vector.shape_cast %202 : vector<1x1x32xf32> to vector<1x32xf32>
    %204 = vector.broadcast %203 : vector<1x32xf32> to vector<8x32xf32>
    %205 = arith.addf %201, %204 : vector<8x32xf32>
    %c1_136 = arith.constant 1 : index
    %c0_137 = arith.constant 0 : index
    %c0_138 = arith.constant 0 : index
    %206 = vector.load %arg13[%c1_136, %c0_137, %c0_138] : memref<2x1x32xf32, #tpu.memory_space<vmem>>, vector<1x1x32xf32>
    %207 = vector.shape_cast %206 : vector<1x1x32xf32> to vector<1x32xf32>
    %c1_139 = arith.constant 1 : index
    %c0_140 = arith.constant 0 : index
    %c0_141 = arith.constant 0 : index
    %208 = vector.load %arg14[%c1_139, %c0_140, %c0_141] : memref<2x1x32xf32, #tpu.memory_space<vmem>>, vector<1x1x32xf32>
    %209 = vector.shape_cast %208 : vector<1x1x32xf32> to vector<1x32xf32>
    %cst_142 = arith.constant dense<0.000000e+00> : vector<8xf32>
    %210 = vector.multi_reduction <add>, %205, %cst_142 [1] : vector<8x32xf32> to vector<8xf32>
    %211 = vector.shape_cast %210 : vector<8xf32> to vector<8x1xf32>
    %cst_143 = arith.constant 3.200000e+01 : f32
    %212 = vector.broadcast %cst_143 : f32 to vector<8x1xf32>
    %213 = arith.divf %211, %212 : vector<8x1xf32>
    %214 = vector.broadcast %213 : vector<8x1xf32> to vector<8x32xf32>
    %215 = arith.subf %205, %214 : vector<8x32xf32>
    %216 = arith.mulf %215, %215 : vector<8x32xf32>
    %cst_144 = arith.constant dense<0.000000e+00> : vector<8xf32>
    %217 = vector.multi_reduction <add>, %216, %cst_144 [1] : vector<8x32xf32> to vector<8xf32>
    %218 = vector.shape_cast %217 : vector<8xf32> to vector<8x1xf32>
    %cst_145 = arith.constant 0.0322580636 : f32
    %219 = vector.broadcast %cst_145 : f32 to vector<8x1xf32>
    %220 = arith.mulf %218, %219 : vector<8x1xf32>
    %221 = math.sqrt %220 : vector<8x1xf32>
    %cst_146 = arith.constant 9.99999997E-7 : f32
    %222 = vector.broadcast %cst_146 : f32 to vector<8x1xf32>
    %223 = arith.addf %221, %222 : vector<8x1xf32>
    %224 = tpu.reciprocal %223 {approx = true} : vector<8x1xf32> -> vector<8x1xf32>
    %225 = vector.broadcast %213 : vector<8x1xf32> to vector<8x32xf32>
    %226 = arith.subf %205, %225 : vector<8x32xf32>
    %227 = vector.broadcast %207 : vector<1x32xf32> to vector<8x32xf32>
    %228 = arith.mulf %227, %226 : vector<8x32xf32>
    %229 = vector.broadcast %224 : vector<8x1xf32> to vector<8x32xf32>
    %230 = arith.mulf %228, %229 : vector<8x32xf32>
    %231 = vector.broadcast %209 : vector<1x32xf32> to vector<8x32xf32>
    %232 = arith.addf %230, %231 : vector<8x32xf32>
    %c1_147 = arith.constant 1 : index
    %c0_148 = arith.constant 0 : index
    %c0_149 = arith.constant 0 : index
    %233 = vector.load %arg15[%c1_147, %c0_148, %c0_149] : memref<2x32x64xf32, #tpu.memory_space<vmem>>, vector<1x32x64xf32>
    %234 = vector.shape_cast %233 : vector<1x32x64xf32> to vector<32x64xf32>
    %cst_150 = arith.constant dense<0.000000e+00> : vector<8x64xf32>
    %235 = tpu.matmul %232, %234, %cst_150 {dimension_numbers = #tpu.dot_dimension_numbers<[1], [0], [0], [1], [0, 0, 1, 1], [], []>} : vector<8x32xf32>, vector<32x64xf32>, vector<8x64xf32> -> vector<8x64xf32>
    %c1_151 = arith.constant 1 : index
    %c0_152 = arith.constant 0 : index
    %c0_153 = arith.constant 0 : index
    %236 = vector.load %arg16[%c1_151, %c0_152, %c0_153] : memref<2x1x64xf32, #tpu.memory_space<vmem>>, vector<1x1x64xf32>
    %237 = vector.shape_cast %236 : vector<1x1x64xf32> to vector<1x64xf32>
    %238 = vector.broadcast %237 : vector<1x64xf32> to vector<8x64xf32>
    %239 = arith.addf %235, %238 : vector<8x64xf32>
    %cst_154 = arith.constant 0.000000e+00 : f32
    %240 = vector.broadcast %cst_154 : f32 to vector<8x64xf32>
    %241 = arith.maximumf %239, %240 : vector<8x64xf32>
    %c1_155 = arith.constant 1 : index
    %c0_156 = arith.constant 0 : index
    %c0_157 = arith.constant 0 : index
    %242 = vector.load %arg17[%c1_155, %c0_156, %c0_157] : memref<2x64x32xf32, #tpu.memory_space<vmem>>, vector<1x64x32xf32>
    %243 = vector.shape_cast %242 : vector<1x64x32xf32> to vector<64x32xf32>
    %cst_158 = arith.constant dense<0.000000e+00> : vector<8x32xf32>
    %244 = tpu.matmul %241, %243, %cst_158 {dimension_numbers = #tpu.dot_dimension_numbers<[1], [0], [0], [1], [0, 0, 1, 1], [], []>} : vector<8x64xf32>, vector<64x32xf32>, vector<8x32xf32> -> vector<8x32xf32>
    %245 = arith.addf %205, %244 : vector<8x32xf32>
    %c1_159 = arith.constant 1 : index
    %c0_160 = arith.constant 0 : index
    %c0_161 = arith.constant 0 : index
    %246 = vector.load %arg18[%c1_159, %c0_160, %c0_161] : memref<2x1x32xf32, #tpu.memory_space<vmem>>, vector<1x1x32xf32>
    %247 = vector.shape_cast %246 : vector<1x1x32xf32> to vector<1x32xf32>
    %248 = vector.broadcast %247 : vector<1x32xf32> to vector<8x32xf32>
    %249 = arith.addf %245, %248 : vector<8x32xf32>
    %c0_162 = arith.constant 0 : index
    %c0_163 = arith.constant 0 : index
    %c0_164 = arith.constant 0 : index
    %250 = vector.load %arg19[%c0_162, %c0_163, %c0_164] : memref<1x8x32xf32, #tpu.memory_space<vmem>>, vector<1x8x32xf32>
    %251 = vector.shape_cast %250 : vector<1x8x32xf32> to vector<8x32xf32>
    %252 = vector.shape_cast %249 : vector<8x32xf32> to vector<1x8x32xf32>
    tpu.vector_store %arg19[%c0_162, %c0_163, %c0_164], %252 {strides = array<i32>} : memref<1x8x32xf32, #tpu.memory_space<vmem>>, vector<1x8x32xf32>,
    return
  }
  func.func @transform_0(%arg0: i32) -> (i32, i32, i32) {
    %c0_i32 = arith.constant 0 : i32
    %c0_i32_0 = arith.constant 0 : i32
    %c0_i32_1 = arith.constant 0 : i32
    return %arg0, %c0_i32, %c0_i32_0 : i32, i32, i32
  }
  func.func @transform_1(%arg0: i32) -> (i32, i32, i32) {
    %c0_i32 = arith.constant 0 : i32
    %c0_i32_0 = arith.constant 0 : i32
    %c0_i32_1 = arith.constant 0 : i32
    return %arg0, %c0_i32, %c0_i32_0 : i32, i32, i32
  }
  func.func @transform_2(%arg0: i32) -> (i32, i32, i32) {
    %c0_i32 = arith.constant 0 : i32
    %c0_i32_0 = arith.constant 0 : i32
    %c0_i32_1 = arith.constant 0 : i32
    %c0_i32_2 = arith.constant 0 : i32
    return %c0_i32, %c0_i32_0, %c0_i32_1 : i32, i32, i32
  }
  func.func @transform_3(%arg0: i32) -> (i32, i32, i32) {
    %c0_i32 = arith.constant 0 : i32
    %c0_i32_0 = arith.constant 0 : i32
    %c0_i32_1 = arith.constant 0 : i32
    %c0_i32_2 = arith.constant 0 : i32
    return %c0_i32, %c0_i32_0, %c0_i32_1 : i32, i32, i32
  }
  func.func @transform_4(%arg0: i32) -> (i32, i32, i32, i32) {
    %c0_i32 = arith.constant 0 : i32
    %c0_i32_0 = arith.constant 0 : i32
    %c0_i32_1 = arith.constant 0 : i32
    %c0_i32_2 = arith.constant 0 : i32
    %c0_i32_3 = arith.constant 0 : i32
    return %c0_i32, %c0_i32_0, %c0_i32_1, %c0_i32_2 : i32, i32, i32, i32
  }
  func.func @transform_5(%arg0: i32) -> (i32, i32, i32, i32) {
    %c0_i32 = arith.constant 0 : i32
    %c0_i32_0 = arith.constant 0 : i32
    %c0_i32_1 = arith.constant 0 : i32
    %c0_i32_2 = arith.constant 0 : i32
    %c0_i32_3 = arith.constant 0 : i32
    return %c0_i32, %c0_i32_0, %c0_i32_1, %c0_i32_2 : i32, i32, i32, i32
  }
  func.func @transform_6(%arg0: i32) -> (i32, i32, i32, i32) {
    %c0_i32 = arith.constant 0 : i32
    %c0_i32_0 = arith.constant 0 : i32
    %c0_i32_1 = arith.constant 0 : i32
    %c0_i32_2 = arith.constant 0 : i32
    %c0_i32_3 = arith.constant 0 : i32
    return %c0_i32, %c0_i32_0, %c0_i32_1, %c0_i32_2 : i32, i32, i32, i32
  }
  func.func @transform_7(%arg0: i32) -> (i32, i32, i32, i32) {
    %c0_i32 = arith.constant 0 : i32
    %c0_i32_0 = arith.constant 0 : i32
    %c0_i32_1 = arith.constant 0 : i32
    %c0_i32_2 = arith.constant 0 : i32
    %c0_i32_3 = arith.constant 0 : i32
    return %c0_i32, %c0_i32_0, %c0_i32_1, %c0_i32_2 : i32, i32, i32, i32
  }
  func.func @transform_8(%arg0: i32) -> (i32, i32, i32, i32) {
    %c0_i32 = arith.constant 0 : i32
    %c0_i32_0 = arith.constant 0 : i32
    %c0_i32_1 = arith.constant 0 : i32
    %c0_i32_2 = arith.constant 0 : i32
    %c0_i32_3 = arith.constant 0 : i32
    return %c0_i32, %c0_i32_0, %c0_i32_1, %c0_i32_2 : i32, i32, i32, i32
  }
  func.func @transform_9(%arg0: i32) -> (i32, i32, i32, i32) {
    %c0_i32 = arith.constant 0 : i32
    %c0_i32_0 = arith.constant 0 : i32
    %c0_i32_1 = arith.constant 0 : i32
    %c0_i32_2 = arith.constant 0 : i32
    %c0_i32_3 = arith.constant 0 : i32
    return %c0_i32, %c0_i32_0, %c0_i32_1, %c0_i32_2 : i32, i32, i32, i32
  }
  func.func @transform_10(%arg0: i32) -> (i32, i32, i32, i32) {
    %c0_i32 = arith.constant 0 : i32
    %c0_i32_0 = arith.constant 0 : i32
    %c0_i32_1 = arith.constant 0 : i32
    %c0_i32_2 = arith.constant 0 : i32
    %c0_i32_3 = arith.constant 0 : i32
    return %c0_i32, %c0_i32_0, %c0_i32_1, %c0_i32_2 : i32, i32, i32, i32
  }
  func.func @transform_11(%arg0: i32) -> (i32, i32, i32) {
    %c0_i32 = arith.constant 0 : i32
    %c0_i32_0 = arith.constant 0 : i32
    %c0_i32_1 = arith.constant 0 : i32
    %c0_i32_2 = arith.constant 0 : i32
    return %c0_i32, %c0_i32_0, %c0_i32_1 : i32, i32, i32
  }
  func.func @transform_12(%arg0: i32) -> (i32, i32, i32) {
    %c0_i32 = arith.constant 0 : i32
    %c0_i32_0 = arith.constant 0 : i32
    %c0_i32_1 = arith.constant 0 : i32
    %c0_i32_2 = arith.constant 0 : i32
    return %c0_i32, %c0_i32_0, %c0_i32_1 : i32, i32, i32
  }
  func.func @transform_13(%arg0: i32) -> (i32, i32, i32) {
    %c0_i32 = arith.constant 0 : i32
    %c0_i32_0 = arith.constant 0 : i32
    %c0_i32_1 = arith.constant 0 : i32
    %c0_i32_2 = arith.constant 0 : i32
    return %c0_i32, %c0_i32_0, %c0_i32_1 : i32, i32, i32
  }
  func.func @transform_14(%arg0: i32) -> (i32, i32, i32) {
    %c0_i32 = arith.constant 0 : i32
    %c0_i32_0 = arith.constant 0 : i32
    %c0_i32_1 = arith.constant 0 : i32
    %c0_i32_2 = arith.constant 0 : i32
    return %c0_i32, %c0_i32_0, %c0_i32_1 : i32, i32, i32
  }
  func.func @transform_15(%arg0: i32) -> (i32, i32, i32) {
    %c0_i32 = arith.constant 0 : i32
    %c0_i32_0 = arith.constant 0 : i32
    %c0_i32_1 = arith.constant 0 : i32
    %c0_i32_2 = arith.constant 0 : i32
    return %c0_i32, %c0_i32_0, %c0_i32_1 : i32, i32, i32
  }
  func.func @transform_16(%arg0: i32) -> (i32, i32, i32) {
    %c0_i32 = arith.constant 0 : i32
    %c0_i32_0 = arith.constant 0 : i32
    %c0_i32_1 = arith.constant 0 : i32
    %c0_i32_2 = arith.constant 0 : i32
    return %c0_i32, %c0_i32_0, %c0_i32_1 : i32, i32, i32
  }
  func.func @transform_17(%arg0: i32) -> (i32, i32, i32) {
    %c0_i32 = arith.constant 0 : i32
    %c0_i32_0 = arith.constant 0 : i32
    %c0_i32_1 = arith.constant 0 : i32
    %c0_i32_2 = arith.constant 0 : i32
    return %c0_i32, %c0_i32_0, %c0_i32_1 : i32, i32, i32
  }
  func.func @transform_18(%arg0: i32) -> (i32, i32, i32) {
    %c0_i32 = arith.constant 0 : i32
    %c0_i32_0 = arith.constant 0 : i32
    %c0_i32_1 = arith.constant 0 : i32
    return %arg0, %c0_i32, %c0_i32_0 : i32, i32, i32
  }
}

</mosaic_0001>

<llo_original>
// kernel: encoder_forward.1
$region0: #{encoder_forward.1}
  #allocation0 [shape = 'u32[]', space=smem, size = 0x4, offset = 0x4, fixed_abs, tag = 'smem constant byte address 0x4 - core index']
  #allocation1 [shape = 'u32[72,128]{1,0:T(1,128)}', space=vmem, size = 0x9000, scoped, tag = 'internal scratch']
  %s0 = inlined_call_operand.vmem [shape: f32[2,8,32], index: 0, kind: input, shape index: {}]
  %s1 = inlined_call_operand.vmem [shape: f32[2,1,8], index: 1, kind: input, shape index: {}]
  %s2 = inlined_call_operand.vmem [shape: f32[2,1,32], index: 2, kind: input, shape index: {}]
  %s3 = inlined_call_operand.vmem [shape: f32[2,1,32], index: 3, kind: input, shape index: {}]
  %s4 = inlined_call_operand.vmem [shape: f32[2,4,32,8], index: 4, kind: input, shape index: {}]
  %s5 = inlined_call_operand.vmem [shape: f32[2,4,1,8], index: 5, kind: input, shape index: {}]
  %s6 = inlined_call_operand.vmem [shape: f32[2,4,32,8], index: 6, kind: input, shape index: {}]
  %s7 = inlined_call_operand.vmem [shape: f32[2,4,1,8], index: 7, kind: input, shape index: {}]
  %s8 = inlined_call_operand.vmem [shape: f32[2,4,32,8], index: 8, kind: input, shape index: {}]
  %s9 = inlined_call_operand.vmem [shape: f32[2,4,1,8], index: 9, kind: input, shape index: {}]
  %s10 = inlined_call_operand.vmem [shape: f32[2,4,8,32], index: 10, kind: input, shape index: {}]
  %s11 = inlined_call_operand.vmem [shape: f32[2,1,32], index: 11, kind: input, shape index: {}]
  %s12 = inlined_call_operand.vmem [shape: f32[2,1,32], index: 12, kind: input, shape index: {}]
  %s13 = inlined_call_operand.vmem [shape: f32[2,1,32], index: 13, kind: input, shape index: {}]
  %s14 = inlined_call_operand.vmem [shape: f32[2,32,64], index: 14, kind: input, shape index: {}]
  %s15 = inlined_call_operand.vmem [shape: f32[2,1,64], index: 15, kind: input, shape index: {}]
  %s16 = inlined_call_operand.vmem [shape: f32[2,64,32], index: 16, kind: input, shape index: {}]
  %s17 = inlined_call_operand.vmem [shape: f32[2,1,32], index: 17, kind: input, shape index: {}]
  %s18 = inlined_call_operand.hbm [shape: f32[2,8,32], index: 18, kind: output, shape index: {}]
  %s19 = sld [smem:[#allocation0]]
  $region105: #{encoder_forward.1} parent=0
    _
  %s21 = ssub.s32 1, %s19
  %s22 = scalar_select 0, %s21, %s19
  $region1: #{encoder_forward.1} parent=0
    #allocation2 [shape = 'u8[8192]{0}', space=vmem, size = 0x2000, scoped, tag = 'output window, operand 0']
    #allocation3 [shape = 's32[2]{0}', space=sflag, size = 0x8, scoped, tag = 'scoped memory for encoder_forward.1']
    %23 = vsyncpa [#allocation3], 0
    %s24 = scalar_lea.sflag [#allocation3], 1
    %25 = vsyncpa %s24, 0
    loop: start=0, step=1, limit=4
    $region2: #{encoder_forward.1} parent=1 // loop_pre_header
      _
    $region3: #{encoder_forward.1} parent=1 // loop_header
      %s27 = sphi 0, %s31
      %p28 = scmp.ge.s32.totalorder %s27, 4
      %s37 = sphi 0, %s39
      %s40 = sphi 0, %s37
      %s41 = sphi 0, %s40
      %s57 = sphi 0, %s41
      %s63 = sphi 0, %s65
      %s66 = sphi 0, %s63
      %s67 = sphi 0, %s66
      %s83 = sphi 0, %s67
      %s87 = sphi 0, %s87
      %s89 = sphi 0, %s87
      %s90 = sphi 0, %s89
      %s104 = sphi 0, %s90
      %s108 = sphi 0, %s108
      %s110 = sphi 0, %s108
      %s111 = sphi 0, %s110
      %s125 = sphi 0, %s111
      %s129 = sphi 0, %s129
      %s131 = sphi 0, %s129
      %s132 = sphi 0, %s131
      %s146 = sphi 0, %s132
      %s150 = sphi 0, %s150
      %s152 = sphi 0, %s150
      %s153 = sphi 0, %s152
      %s167 = sphi 0, %s153
      %s171 = sphi 0, %s171
      %s173 = sphi 0, %s171
      %s174 = sphi 0, %s173
      %s188 = sphi 0, %s174
      %s192 = sphi 0, %s192
      %s194 = sphi 0, %s192
      %s195 = sphi 0, %s194
      %s209 = sphi 0, %s195
      %s213 = sphi 0, %s213
      %s215 = sphi 0, %s213
      %s216 = sphi 0, %s215
      %s230 = sphi 0, %s216
      %s234 = sphi 0, %s234
      %s236 = sphi 0, %s234
      %s237 = sphi 0, %s236
      %s251 = sphi 0, %s237
      %s255 = sphi 0, %s255
      %s257 = sphi 0, %s255
      %s258 = sphi 0, %s257
      %s272 = sphi 0, %s258
      %s276 = sphi 0, %s276
      %s278 = sphi 0, %s276
      %s279 = sphi 0, %s278
      %s293 = sphi 0, %s279
      %s297 = sphi 0, %s297
      %s299 = sphi 0, %s297
      %s300 = sphi 0, %s299
      %s314 = sphi 0, %s300
      %s318 = sphi 0, %s318
      %s320 = sphi 0, %s318
      %s321 = sphi 0, %s320
      %s335 = sphi 0, %s321
      %s339 = sphi 0, %s339
      %s341 = sphi 0, %s339
      %s342 = sphi 0, %s341
      %s356 = sphi 0, %s342
      %s360 = sphi 0, %s360
      %s362 = sphi 0, %s360
      %s363 = sphi 0, %s362
      %s377 = sphi 0, %s363
      %s381 = sphi 0, %s381
      %s383 = sphi 0, %s381
      %s384 = sphi 0, %s383
      %s398 = sphi 0, %s384
      %s402 = sphi 0, %s402
      %s404 = sphi 0, %s402
      %s405 = sphi 0, %s404
      %s419 = sphi 0, %s405
      %s425 = sphi 0, %s427
      %s428 = sphi 0, %s425
      %s429 = sphi 0, %s428
      %s445 = sphi 0, %s429
    $region4: #{encoder_forward.1} parent=1 // loop_header_branch
      %30 = sbr.rel (%p28) target = $region8
    $region5: #{encoder_forward.1} parent=1 // loop_body
      %s32 = ssub.s32 %s27, 1
      %s33 = ssub.s32 %s27, 2
      %s34 = sadd.s32 %s27, 1
      %s35 = ssub.s32 %s27, %s34
      %p36 = scmp.eq.s32.totalorder %s35, 0
      %s38 = sadd.s32 %s37, 1
      %s39 = scalar_select %p36, %s37, %s38
      %p42 = pneg %p36
      %p43 = scmp.eq.s32.totalorder %s27, 1
      %p44 = por %p42, %p43
      %p45 = scmp.ne.s32.totalorder %s37, %s40
      %p46 = scmp.eq.s32.totalorder %s27, 0
      %p47 = por %p45, %p46
      %p48 = scmp.ne.s32.totalorder %s37, %s40
      %p49 = scmp.eq.s32.totalorder %s32, 1
      %p50 = por %p48, %p49
      %p51 = scmp.ne.s32.totalorder %s40, %s41
      %p52 = scmp.eq.s32.totalorder %s32, 0
      %p53 = por %p51, %p52
      %p54 = scmp.ne.s32.totalorder %s40, %s41
      %p55 = scmp.eq.s32.totalorder %s33, 1
      %p56 = por %p54, %p55
      %p58 = scmp.ne.s32.totalorder %s41, %s57
      %p59 = scmp.eq.s32.totalorder %s33, 0
      %p60 = por %p58, %p59
      %s61 = ssub.s32 %s27, %s34
      %p62 = scmp.eq.s32.totalorder %s61, 0
      %s64 = sadd.s32 %s63, 1
      %s65 = scalar_select %p62, %s63, %s64
      %p68 = pneg %p62
      %p69 = scmp.eq.s32.totalorder %s27, 1
      %p70 = por %p68, %p69
      %p71 = scmp.ne.s32.totalorder %s63, %s66
      %p72 = scmp.eq.s32.totalorder %s27, 0
      %p73 = por %p71, %p72
      %p74 = scmp.ne.s32.totalorder %s63, %s66
      %p75 = scmp.eq.s32.totalorder %s32, 1
      %p76 = por %p74, %p75
      %p77 = scmp.ne.s32.totalorder %s66, %s67
      %p78 = scmp.eq.s32.totalorder %s32, 0
      %p79 = por %p77, %p78
      %p80 = scmp.ne.s32.totalorder %s66, %s67
      %p81 = scmp.eq.s32.totalorder %s33, 1
      %p82 = por %p80, %p81
      %p84 = scmp.ne.s32.totalorder %s67, %s83
      %p85 = scmp.eq.s32.totalorder %s33, 0
      %p86 = por %p84, %p85
      %s88 = sadd.s32 %s87, 1
      %p91 = scmp.eq.s32.totalorder %s27, 1
      %p92 = scmp.ne.s32.totalorder %s87, %s89
      %p93 = scmp.eq.s32.totalorder %s27, 0
      %p94 = por %p92, %p93
      %p95 = scmp.ne.s32.totalorder %s87, %s89
      %p96 = scmp.eq.s32.totalorder %s32, 1
      %p97 = por %p95, %p96
      %p98 = scmp.ne.s32.totalorder %s89, %s90
      %p99 = scmp.eq.s32.totalorder %s32, 0
      %p100 = por %p98, %p99
      %p101 = scmp.ne.s32.totalorder %s89, %s90
      %p102 = scmp.eq.s32.totalorder %s33, 1
      %p103 = por %p101, %p102
      %p105 = scmp.ne.s32.totalorder %s90, %s104
      %p106 = scmp.eq.s32.totalorder %s33, 0
      %p107 = por %p105, %p106
      %s109 = sadd.s32 %s108, 1
      %p112 = scmp.eq.s32.totalorder %s27, 1
      %p113 = scmp.ne.s32.totalorder %s108, %s110
      %p114 = scmp.eq.s32.totalorder %s27, 0
      %p115 = por %p113, %p114
      %p116 = scmp.ne.s32.totalorder %s108, %s110
      %p117 = scmp.eq.s32.totalorder %s32, 1
      %p118 = por %p116, %p117
      %p119 = scmp.ne.s32.totalorder %s110, %s111
      %p120 = scmp.eq.s32.totalorder %s32, 0
      %p121 = por %p119, %p120
      %p122 = scmp.ne.s32.totalorder %s110, %s111
      %p123 = scmp.eq.s32.totalorder %s33, 1
      %p124 = por %p122, %p123
      %p126 = scmp.ne.s32.totalorder %s111, %s125
      %p127 = scmp.eq.s32.totalorder %s33, 0
      %p128 = por %p126, %p127
      %s130 = sadd.s32 %s129, 1
      %p133 = scmp.eq.s32.totalorder %s27, 1
      %p134 = scmp.ne.s32.totalorder %s129, %s131
      %p135 = scmp.eq.s32.totalorder %s27, 0
      %p136 = por %p134, %p135
      %p137 = scmp.ne.s32.totalorder %s129, %s131
      %p138 = scmp.eq.s32.totalorder %s32, 1
      %p139 = por %p137, %p138
      %p140 = scmp.ne.s32.totalorder %s131, %s132
      %p141 = scmp.eq.s32.totalorder %s32, 0
      %p142 = por %p140, %p141
      %p143 = scmp.ne.s32.totalorder %s131, %s132
      %p144 = scmp.eq.s32.totalorder %s33, 1
      %p145 = por %p143, %p144
      %p147 = scmp.ne.s32.totalorder %s132, %s146
      %p148 = scmp.eq.s32.totalorder %s33, 0
      %p149 = por %p147, %p148
      %s151 = sadd.s32 %s150, 1
      %p154 = scmp.eq.s32.totalorder %s27, 1
      %p155 = scmp.ne.s32.totalorder %s150, %s152
      %p156 = scmp.eq.s32.totalorder %s27, 0
      %p157 = por %p155, %p156
      %p158 = scmp.ne.s32.totalorder %s150, %s152
      %p159 = scmp.eq.s32.totalorder %s32, 1
      %p160 = por %p158, %p159
      %p161 = scmp.ne.s32.totalorder %s152, %s153
      %p162 = scmp.eq.s32.totalorder %s32, 0
      %p163 = por %p161, %p162
      %p164 = scmp.ne.s32.totalorder %s152, %s153
      %p165 = scmp.eq.s32.totalorder %s33, 1
      %p166 = por %p164, %p165
      %p168 = scmp.ne.s32.totalorder %s153, %s167
      %p169 = scmp.eq.s32.totalorder %s33, 0
      %p170 = por %p168, %p169
      %s172 = sadd.s32 %s171, 1
      %p175 = scmp.eq.s32.totalorder %s27, 1
      %p176 = scmp.ne.s32.totalorder %s171, %s173
      %p177 = scmp.eq.s32.totalorder %s27, 0
      %p178 = por %p176, %p177
      %p179 = scmp.ne.s32.totalorder %s171, %s173
      %p180 = scmp.eq.s32.totalorder %s32, 1
      %p181 = por %p179, %p180
      %p182 = scmp.ne.s32.totalorder %s173, %s174
      %p183 = scmp.eq.s32.totalorder %s32, 0
      %p184 = por %p182, %p183
      %p185 = scmp.ne.s32.totalorder %s173, %s174
      %p186 = scmp.eq.s32.totalorder %s33, 1
      %p187 = por %p185, %p186
      %p189 = scmp.ne.s32.totalorder %s174, %s188
      %p190 = scmp.eq.s32.totalorder %s33, 0
      %p191 = por %p189, %p190
      %s193 = sadd.s32 %s192, 1
      %p196 = scmp.eq.s32.totalorder %s27, 1
      %p197 = scmp.ne.s32.totalorder %s192, %s194
      %p198 = scmp.eq.s32.totalorder %s27, 0
      %p199 = por %p197, %p198
      %p200 = scmp.ne.s32.totalorder %s192, %s194
      %p201 = scmp.eq.s32.totalorder %s32, 1
      %p202 = por %p200, %p201
      %p203 = scmp.ne.s32.totalorder %s194, %s195
      %p204 = scmp.eq.s32.totalorder %s32, 0
      %p205 = por %p203, %p204
      %p206 = scmp.ne.s32.totalorder %s194, %s195
      %p207 = scmp.eq.s32.totalorder %s33, 1
      %p208 = por %p206, %p207
      %p210 = scmp.ne.s32.totalorder %s195, %s209
      %p211 = scmp.eq.s32.totalorder %s33, 0
      %p212 = por %p210, %p211
      %s214 = sadd.s32 %s213, 1
      %p217 = scmp.eq.s32.totalorder %s27, 1
      %p218 = scmp.ne.s32.totalorder %s213, %s215
      %p219 = scmp.eq.s32.totalorder %s27, 0
      %p220 = por %p218, %p219
      %p221 = scmp.ne.s32.totalorder %s213, %s215
      %p222 = scmp.eq.s32.totalorder %s32, 1
      %p223 = por %p221, %p222
      %p224 = scmp.ne.s32.totalorder %s215, %s216
      %p225 = scmp.eq.s32.totalorder %s32, 0
      %p226 = por %p224, %p225
      %p227 = scmp.ne.s32.totalorder %s215, %s216
      %p228 = scmp.eq.s32.totalorder %s33, 1
      %p229 = por %p227, %p228
      %p231 = scmp.ne.s32.totalorder %s216, %s230
      %p232 = scmp.eq.s32.totalorder %s33, 0
      %p233 = por %p231, %p232
      %s235 = sadd.s32 %s234, 1
      %p238 = scmp.eq.s32.totalorder %s27, 1
      %p239 = scmp.ne.s32.totalorder %s234, %s236
      %p240 = scmp.eq.s32.totalorder %s27, 0
      %p241 = por %p239, %p240
      %p242 = scmp.ne.s32.totalorder %s234, %s236
      %p243 = scmp.eq.s32.totalorder %s32, 1
      %p244 = por %p242, %p243
      %p245 = scmp.ne.s32.totalorder %s236, %s237
      %p246 = scmp.eq.s32.totalorder %s32, 0
      %p247 = por %p245, %p246
      %p248 = scmp.ne.s32.totalorder %s236, %s237
      %p249 = scmp.eq.s32.totalorder %s33, 1
      %p250 = por %p248, %p249
      %p252 = scmp.ne.s32.totalorder %s237, %s251
      %p253 = scmp.eq.s32.totalorder %s33, 0
      %p254 = por %p252, %p253
      %s256 = sadd.s32 %s255, 1
      %p259 = scmp.eq.s32.totalorder %s27, 1
      %p260 = scmp.ne.s32.totalorder %s255, %s257
      %p261 = scmp.eq.s32.totalorder %s27, 0
      %p262 = por %p260, %p261
      %p263 = scmp.ne.s32.totalorder %s255, %s257
      %p264 = scmp.eq.s32.totalorder %s32, 1
      %p265 = por %p263, %p264
      %p266 = scmp.ne.s32.totalorder %s257, %s258
      %p267 = scmp.eq.s32.totalorder %s32, 0
      %p268 = por %p266, %p267
      %p269 = scmp.ne.s32.totalorder %s257, %s258
      %p270 = scmp.eq.s32.totalorder %s33, 1
      %p271 = por %p269, %p270
      %p273 = scmp.ne.s32.totalorder %s258, %s272
      %p274 = scmp.eq.s32.totalorder %s33, 0
      %p275 = por %p273, %p274
      %s277 = sadd.s32 %s276, 1
      %p280 = scmp.eq.s32.totalorder %s27, 1
      %p281 = scmp.ne.s32.totalorder %s276, %s278
      %p282 = scmp.eq.s32.totalorder %s27, 0
      %p283 = por %p281, %p282
      %p284 = scmp.ne.s32.totalorder %s276, %s278
      %p285 = scmp.eq.s32.totalorder %s32, 1
      %p286 = por %p284, %p285
      %p287 = scmp.ne.s32.totalorder %s278, %s279
      %p288 = scmp.eq.s32.totalorder %s32, 0
      %p289 = por %p287, %p288
      %p290 = scmp.ne.s32.totalorder %s278, %s279
      %p291 = scmp.eq.s32.totalorder %s33, 1
      %p292 = por %p290, %p291
      %p294 = scmp.ne.s32.totalorder %s279, %s293
      %p295 = scmp.eq.s32.totalorder %s33, 0
      %p296 = por %p294, %p295
      %s298 = sadd.s32 %s297, 1
      %p301 = scmp.eq.s32.totalorder %s27, 1
      %p302 = scmp.ne.s32.totalorder %s297, %s299
      %p303 = scmp.eq.s32.totalorder %s27, 0
      %p304 = por %p302, %p303
      %p305 = scmp.ne.s32.totalorder %s297, %s299
      %p306 = scmp.eq.s32.totalorder %s32, 1
      %p307 = por %p305, %p306
      %p308 = scmp.ne.s32.totalorder %s299, %s300
      %p309 = scmp.eq.s32.totalorder %s32, 0
      %p310 = por %p308, %p309
      %p311 = scmp.ne.s32.totalorder %s299, %s300
      %p312 = scmp.eq.s32.totalorder %s33, 1
      %p313 = por %p311, %p312
      %p315 = scmp.ne.s32.totalorder %s300, %s314
      %p316 = scmp.eq.s32.totalorder %s33, 0
      %p317 = por %p315, %p316
      %s319 = sadd.s32 %s318, 1
      %p322 = scmp.eq.s32.totalorder %s27, 1
      %p323 = scmp.ne.s32.totalorder %s318, %s320
      %p324 = scmp.eq.s32.totalorder %s27, 0
      %p325 = por %p323, %p324
      %p326 = scmp.ne.s32.totalorder %s318, %s320
      %p327 = scmp.eq.s32.totalorder %s32, 1
      %p328 = por %p326, %p327
      %p329 = scmp.ne.s32.totalorder %s320, %s321
      %p330 = scmp.eq.s32.totalorder %s32, 0
      %p331 = por %p329, %p330
      %p332 = scmp.ne.s32.totalorder %s320, %s321
      %p333 = scmp.eq.s32.totalorder %s33, 1
      %p334 = por %p332, %p333
      %p336 = scmp.ne.s32.totalorder %s321, %s335
      %p337 = scmp.eq.s32.totalorder %s33, 0
      %p338 = por %p336, %p337
      %s340 = sadd.s32 %s339, 1
      %p343 = scmp.eq.s32.totalorder %s27, 1
      %p344 = scmp.ne.s32.totalorder %s339, %s341
      %p345 = scmp.eq.s32.totalorder %s27, 0
      %p346 = por %p344, %p345
      %p347 = scmp.ne.s32.totalorder %s339, %s341
      %p348 = scmp.eq.s32.totalorder %s32, 1
      %p349 = por %p347, %p348
      %p350 = scmp.ne.s32.totalorder %s341, %s342
      %p351 = scmp.eq.s32.totalorder %s32, 0
      %p352 = por %p350, %p351
      %p353 = scmp.ne.s32.totalorder %s341, %s342
      %p354 = scmp.eq.s32.totalorder %s33, 1
      %p355 = por %p353, %p354
      %p357 = scmp.ne.s32.totalorder %s342, %s356
      %p358 = scmp.eq.s32.totalorder %s33, 0
      %p359 = por %p357, %p358
      %s361 = sadd.s32 %s360, 1
      %p364 = scmp.eq.s32.totalorder %s27, 1
      %p365 = scmp.ne.s32.totalorder %s360, %s362
      %p366 = scmp.eq.s32.totalorder %s27, 0
      %p367 = por %p365, %p366
      %p368 = scmp.ne.s32.totalorder %s360, %s362
      %p369 = scmp.eq.s32.totalorder %s32, 1
      %p370 = por %p368, %p369
      %p371 = scmp.ne.s32.totalorder %s362, %s363
      %p372 = scmp.eq.s32.totalorder %s32, 0
      %p373 = por %p371, %p372
      %p374 = scmp.ne.s32.totalorder %s362, %s363
      %p375 = scmp.eq.s32.totalorder %s33, 1
      %p376 = por %p374, %p375
      %p378 = scmp.ne.s32.totalorder %s363, %s377
      %p379 = scmp.eq.s32.totalorder %s33, 0
      %p380 = por %p378, %p379
      %s382 = sadd.s32 %s381, 1
      %p385 = scmp.eq.s32.totalorder %s27, 1
      %p386 = scmp.ne.s32.totalorder %s381, %s383
      %p387 = scmp.eq.s32.totalorder %s27, 0
      %p388 = por %p386, %p387
      %p389 = scmp.ne.s32.totalorder %s381, %s383
      %p390 = scmp.eq.s32.totalorder %s32, 1
      %p391 = por %p389, %p390
      %p392 = scmp.ne.s32.totalorder %s383, %s384
      %p393 = scmp.eq.s32.totalorder %s32, 0
      %p394 = por %p392, %p393
      %p395 = scmp.ne.s32.totalorder %s383, %s384
      %p396 = scmp.eq.s32.totalorder %s33, 1
      %p397 = por %p395, %p396
      %p399 = scmp.ne.s32.totalorder %s384, %s398
      %p400 = scmp.eq.s32.totalorder %s33, 0
      %p401 = por %p399, %p400
      %s403 = sadd.s32 %s402, 1
      %p406 = scmp.eq.s32.totalorder %s27, 1
      %p407 = scmp.ne.s32.totalorder %s402, %s404
      %p408 = scmp.eq.s32.totalorder %s27, 0
      %p409 = por %p407, %p408
      %p410 = scmp.ne.s32.totalorder %s402, %s404
      %p411 = scmp.eq.s32.totalorder %s32, 1
      %p412 = por %p410, %p411
      %p413 = scmp.ne.s32.totalorder %s404, %s405
      %p414 = scmp.eq.s32.totalorder %s32, 0
      %p415 = por %p413, %p414
      %p416 = scmp.ne.s32.totalorder %s404, %s405
      %p417 = scmp.eq.s32.totalorder %s33, 1
      %p418 = por %p416, %p417
      %p420 = scmp.ne.s32.totalorder %s405, %s419
      %p421 = scmp.eq.s32.totalorder %s33, 0
      %p422 = por %p420, %p421
      %s423 = ssub.s32 %s27, %s34
      %p424 = scmp.eq.s32.totalorder %s423, 0
      %s426 = sadd.s32 %s425, 1
      %s427 = scalar_select %p424, %s425, %s426
      %p430 = pneg %p424
      %p431 = scmp.eq.s32.totalorder %s27, 1
      %p432 = por %p430, %p431
      %p433 = scmp.ne.s32.totalorder %s425, %s428
      %p434 = scmp.eq.s32.totalorder %s27, 0
      %p435 = por %p433, %p434
      %p436 = scmp.ne.s32.totalorder %s425, %s428
      %p437 = scmp.eq.s32.totalorder %s32, 1
      %p438 = por %p436, %p437
      %p439 = scmp.ne.s32.totalorder %s428, %s429
      %p440 = scmp.eq.s32.totalorder %s32, 0
      %p441 = por %p439, %p440
      %p442 = scmp.ne.s32.totalorder %s428, %s429
      %p443 = scmp.eq.s32.totalorder %s33, 1
      %p444 = por %p442, %p443
      %p446 = scmp.ne.s32.totalorder %s429, %s445
      %p447 = scmp.eq.s32.totalorder %s33, 0
      %p448 = por %p446, %p447
      %p449 = scmp.le.s32.totalorder 1, %s27
      %p450 = scmp.lt.s32.totalorder %s27, 3
      %p451 = pnand %p449, %p450
      %p452 = pneg %p451
      // Predicated region
      $region9: #{encoder_forward.1} parent=5 // pred_check
        _
      $region10: #{encoder_forward.1} parent=5 // pred_check_branch
        %454 = sbr.rel (%p451) target = $region12
      $region11: #{encoder_forward.1} parent=5 // pred_region
        %s455 = ssub.s32 %s27, 1
        // Predicated region
        $region13: #{encoder_forward.1} parent=11 // pred_check
          %p456 = pneg %p100
        $region14: #{encoder_forward.1} parent=11 // pred_check_branch
          %458 = sbr.rel (%p456) target = $region16
        $region15: #{encoder_forward.1} parent=11 // pred_region
          _
        $region16: #{encoder_forward.1} parent=11 // pred_fallthru
          _
        // Predicated region
        $region17: #{encoder_forward.1} parent=11 // pred_check
          %p459 = pneg %p121
        $region18: #{encoder_forward.1} parent=11 // pred_check_branch
          %461 = sbr.rel (%p459) target = $region20
        $region19: #{encoder_forward.1} parent=11 // pred_region
          _
        $region20: #{encoder_forward.1} parent=11 // pred_fallthru
          _
        // Predicated region
        $region21: #{encoder_forward.1} parent=11 // pred_check
          %p462 = pneg %p142
        $region22: #{encoder_forward.1} parent=11 // pred_check_branch
          %464 = sbr.rel (%p462) target = $region24
        $region23: #{encoder_forward.1} parent=11 // pred_region
          _
        $region24: #{encoder_forward.1} parent=11 // pred_fallthru
          _
        // Predicated region
        $region25: #{encoder_forward.1} parent=11 // pred_check
          %p465 = pneg %p163
        $region26: #{encoder_forward.1} parent=11 // pred_check_branch
          %467 = sbr.rel (%p465) target = $region28
        $region27: #{encoder_forward.1} parent=11 // pred_region
          _
        $region28: #{encoder_forward.1} parent=11 // pred_fallthru
          _
        // Predicated region
        $region29: #{encoder_forward.1} parent=11 // pred_check
          %p468 = pneg %p184
        $region30: #{encoder_forward.1} parent=11 // pred_check_branch
          %470 = sbr.rel (%p468) target = $region32
        $region31: #{encoder_forward.1} parent=11 // pred_region
          _
        $region32: #{encoder_forward.1} parent=11 // pred_fallthru
          _
        // Predicated region
        $region33: #{encoder_forward.1} parent=11 // pred_check
          %p471 = pneg %p205
        $region34: #{encoder_forward.1} parent=11 // pred_check_branch
          %473 = sbr.rel (%p471) target = $region36
        $region35: #{encoder_forward.1} parent=11 // pred_region
          _
        $region36: #{encoder_forward.1} parent=11 // pred_fallthru
          _
        // Predicated region
        $region37: #{encoder_forward.1} parent=11 // pred_check
          %p474 = pneg %p226
        $region38: #{encoder_forward.1} parent=11 // pred_check_branch
          %476 = sbr.rel (%p474) target = $region40
        $region39: #{encoder_forward.1} parent=11 // pred_region
          _
        $region40: #{encoder_forward.1} parent=11 // pred_fallthru
          _
        // Predicated region
        $region41: #{encoder_forward.1} parent=11 // pred_check
          %p477 = pneg %p247
        $region42: #{encoder_forward.1} parent=11 // pred_check_branch
          %479 = sbr.rel (%p477) target = $region44
        $region43: #{encoder_forward.1} parent=11 // pred_region
          _
        $region44: #{encoder_forward.1} parent=11 // pred_fallthru
          _
        // Predicated region
        $region45: #{encoder_forward.1} parent=11 // pred_check
          %p480 = pneg %p268
        $region46: #{encoder_forward.1} parent=11 // pred_check_branch
          %482 = sbr.rel (%p480) target = $region48
        $region47: #{encoder_forward.1} parent=11 // pred_region
          _
        $region48: #{encoder_forward.1} parent=11 // pred_fallthru
          _
        // Predicated region
        $region49: #{encoder_forward.1} parent=11 // pred_check
          %p483 = pneg %p289
        $region50: #{encoder_forward.1} parent=11 // pred_check_branch
          %485 = sbr.rel (%p483) target = $region52
        $region51: #{encoder_forward.1} parent=11 // pred_region
          _
        $region52: #{encoder_forward.1} parent=11 // pred_fallthru
          _
        // Predicated region
        $region53: #{encoder_forward.1} parent=11 // pred_check
          %p486 = pneg %p310
        $region54: #{encoder_forward.1} parent=11 // pred_check_branch
          %488 = sbr.rel (%p486) target = $region56
        $region55: #{encoder_forward.1} parent=11 // pred_region
          _
        $region56: #{encoder_forward.1} parent=11 // pred_fallthru
          _
        // Predicated region
        $region57: #{encoder_forward.1} parent=11 // pred_check
          %p489 = pneg %p331
        $region58: #{encoder_forward.1} parent=11 // pred_check_branch
          %491 = sbr.rel (%p489) target = $region60
        $region59: #{encoder_forward.1} parent=11 // pred_region
          _
        $region60: #{encoder_forward.1} parent=11 // pred_fallthru
          _
        // Predicated region
        $region61: #{encoder_forward.1} parent=11 // pred_check
          %p492 = pneg %p352
        $region62: #{encoder_forward.1} parent=11 // pred_check_branch
          %494 = sbr.rel (%p492) target = $region64
        $region63: #{encoder_forward.1} parent=11 // pred_region
          _
        $region64: #{encoder_forward.1} parent=11 // pred_fallthru
          _
        // Predicated region
        $region65: #{encoder_forward.1} parent=11 // pred_check
          %p495 = pneg %p373
        $region66: #{encoder_forward.1} parent=11 // pred_check_branch
          %497 = sbr.rel (%p495) target = $region68
        $region67: #{encoder_forward.1} parent=11 // pred_region
          _
        $region68: #{encoder_forward.1} parent=11 // pred_fallthru
          _
        // Predicated region
        $region69: #{encoder_forward.1} parent=11 // pred_check
          %p498 = pneg %p394
        $region70: #{encoder_forward.1} parent=11 // pred_check_branch
          %500 = sbr.rel (%p498) target = $region72
        $region71: #{encoder_forward.1} parent=11 // pred_region
          _
        $region72: #{encoder_forward.1} parent=11 // pred_fallthru
          _
        // Predicated region
        $region73: #{encoder_forward.1} parent=11 // pred_check
          %p501 = pneg %p415
        $region74: #{encoder_forward.1} parent=11 // pred_check_branch
          %503 = sbr.rel (%p501) target = $region76
        $region75: #{encoder_forward.1} parent=11 // pred_region
          _
        $region76: #{encoder_forward.1} parent=11 // pred_fallthru
          _
      $region12: #{encoder_forward.1} parent=5 // pred_fallthru
        _
      %p504 = scmp.lt.s32.totalorder %s27, 2
      // Predicated region
      $region77: #{encoder_forward.1} parent=5 // pred_check
        %p505 = pneg %p504
      $region78: #{encoder_forward.1} parent=5 // pred_check_branch
        %507 = sbr.rel (%p505) target = $region80
      $region79: #{encoder_forward.1} parent=5 // pred_region
        // Predicated region
        $region81: #{encoder_forward.1} parent=79 // pred_check
          %p508 = pneg %p47
        $region82: #{encoder_forward.1} parent=79 // pred_check_branch
          %510 = sbr.rel (%p508) target = $region84
        $region83: #{encoder_forward.1} parent=79 // pred_region
          %p511 = scmp.lt.s32.totalorder %s27, 1
          %s512 = scalar_select %p511, %s27, 1
          %s513 = smul.addr %s512, 8
          %s514 = scalar_lea.vmem %s0, %s513
        $region84: #{encoder_forward.1} parent=79 // pred_fallthru
          _
        // Predicated region
        $region85: #{encoder_forward.1} parent=79 // pred_check
          %p515 = pneg %p73
        $region86: #{encoder_forward.1} parent=79 // pred_check_branch
          %517 = sbr.rel (%p515) target = $region88
        $region87: #{encoder_forward.1} parent=79 // pred_region
          %p518 = scmp.lt.s32.totalorder %s27, 1
          %s519 = scalar_select %p518, %s27, 1
          %s520 = scalar_lea.vmem %s1, %s519
        $region88: #{encoder_forward.1} parent=79 // pred_fallthru
          _
      $region80: #{encoder_forward.1} parent=5 // pred_fallthru
        _
      %p521 = scmp.le.s32.totalorder 1, %s27
      %p522 = scmp.lt.s32.totalorder %s27, 3
      %p523 = pnand %p521, %p522
      %p524 = pneg %p523
      // Predicated region
      $region89: #{encoder_forward.1} parent=5 // pred_check
        _
      $region90: #{encoder_forward.1} parent=5 // pred_check_branch
        %526 = sbr.rel (%p523) target = $region92
      $region91: #{encoder_forward.1} parent=5 // pred_region
        %s527 = ssub.s32 %s27, 1
        %p528 = scmp.lt.s32.totalorder %s32, 1
        %s529 = scalar_select %p528, %s32, 1
        %s530 = smul.addr %s529, 8
        %s531 = scalar_lea.vmem %s0, %s530
        %p532 = pneg %p53
        %p533 = pneg %p50
        %p534 = scmp.lt.s32.totalorder %s32, 1
        %s535 = scalar_select %p534, %s32, 1
        %s536 = scalar_lea.vmem %s1, %s535
        %p537 = pneg %p79
        %p538 = pneg %p76
        %p539 = pneg %p100
        %p540 = pneg %p97
        %p541 = pneg %p121
        %p542 = pneg %p118
        %p543 = pneg %p142
        %p544 = pneg %p139
        %p545 = pneg %p163
        %p546 = pneg %p160
        %p547 = pneg %p184
        %p548 = pneg %p181
        %p549 = pneg %p205
        %p550 = pneg %p202
        %p551 = pneg %p226
        %p552 = pneg %p223
        %p553 = pneg %p247
        %p554 = pneg %p244
        %p555 = pneg %p268
        %p556 = pneg %p265
        %p557 = pneg %p289
        %p558 = pneg %p286
        %p559 = pneg %p310
        %p560 = pneg %p307
        %p561 = pneg %p331
        %p562 = pneg %p328
        %p563 = pneg %p352
        %p564 = pneg %p349
        %p565 = pneg %p373
        %p566 = pneg %p370
        %p567 = pneg %p394
        %p568 = pneg %p391
        %p569 = pneg %p415
        %p570 = pneg %p412
        %p571 = pneg %p441
        %p572 = pneg %p438
        %s573 = sand.u32 %s428, 1
        %s574 = scalar_lea.sflag [#allocation3], %s573
        %s575 = sand.u32 %s428, 1
        %s576 = smul.addr %s575, 8
        %s577 = scalar_lea.vmem [#allocation2], %s576
        %p578 = scmp.lt.s32.totalorder %s32, 1
        %s579 = scalar_select %p578, %s32, 1
        %s580 = smul.addr %s579, 8
        %s581 = scalar_lea.vmem %s0, %s580
        %p582 = scmp.lt.s32.totalorder %s32, 1
        %s583 = scalar_select %p582, %s32, 1
        %s584 = scalar_lea.vmem %s1, %s583
        %v585 = vld [vmem:[%s581] sm:$0xff]
        %v586 = vld [vmem:[%s584] sm:$0x1]
        %vm587 = vcmp.eq.f32.partialorder %v586, 0.0
        %v588 = vld [vmem:[%s2] sm:$0x1]
        %v589 = vld [vmem:[%s3] sm:$0x1]
        %vm590 = vcmask 261120
        %v591 = vsel %vm590, %v585, 0.0
        %592 = vadd.xlane.f32.xlu0 %v591
        %v593 = vpop.xlane.xlu0 %592
        %v594 = vrcp.pop 32.0
        %v595 = vmul.f32 32.0, %v594
        %v596 = vsub.f32 1.0, %v595
        %v597 = vmul.f32 %v594, %v596
        %v598 = vadd.f32 %v594, %v597
        %vm599 = vweird.f32 %v594
        %v600 = vsel %vm599, %v594, %v598
        %v601 = vmul.f32 %v593, %v600
        %v602 = vsub.f32 %v585, %v601
        %v603 = vmul.f32 %v602, %v602
        %v604 = vsel %vm590, %v603, 0.0
        %605 = vadd.xlane.f32.xlu0 %v604
        %v606 = vpop.xlane.xlu0 %605
        %v607 = vmul.f32 %v606, 0.032258064
        %v608 = vrsqrt.pop %v607
        %v609 = vmul.f32 %v608, %v607
        %v610 = vmul.f32 %v609, %v608
        %v611 = vmul.f32 0.5, %v610
        %v612 = vsub.f32 1.5, %v611
        %v613 = vmul.f32 %v608, %v612
        %v614 = vmul.f32 %v607, %v613
        %vm615 = vcmp.eq.f32.partialorder %v607, inf
        %v616 = vsel %vm615, %v607, %v614
        %vm617 = vcmp.eq.f32.partialorder %v607, 0.0
        %v618 = vand.u32 %v607, 2147483648
        %v619 = vsel %vm617, %v618, %v616
        %v620 = vadd.f32 %v619, 1e-06
        %v621 = vrcp.pop %v620
        %v623 = vperm.slane %v588, 0
        %v625 = vmul.f32 %v623, %v602
        %v626 = vmul.f32 %v625, %v621
        %v628 = vperm.slane %v589, 0
        %v630 = vadd.f32 %v626, %v628
        %v631 = vld [vmem:[%s4] sm:$0xff]
        %v632 = vld [vmem:[%s4 + $0x8] sm:$0xff]
        %v633 = vld [vmem:[%s4 + $0x10] sm:$0xff]
        %v634 = vld [vmem:[%s4 + $0x18] sm:$0xff]
        %v635 = vld [vmem:[%s4 + $0x20] sm:$0xff]
        %v636 = vld [vmem:[%s4 + $0x28] sm:$0xff]
        %v637 = vld [vmem:[%s4 + $0x30] sm:$0xff]
        %v638 = vld [vmem:[%s4 + $0x38] sm:$0xff]
        %v639 = vld [vmem:[%s4 + $0x40] sm:$0xff]
        %v640 = vld [vmem:[%s4 + $0x48] sm:$0xff]
        %v641 = vld [vmem:[%s4 + $0x50] sm:$0xff]
        %v642 = vld [vmem:[%s4 + $0x58] sm:$0xff]
        %v643 = vld [vmem:[%s4 + $0x60] sm:$0xff]
        %v644 = vld [vmem:[%s4 + $0x68] sm:$0xff]
        %v645 = vld [vmem:[%s4 + $0x70] sm:$0xff]
        %v646 = vld [vmem:[%s4 + $0x78] sm:$0xff]
        %v647 = vld [vmem:[%s5] sm:$0x1]
        %v648 = vld [vmem:[%s5 + $0x1] sm:$0x1]
        %v649 = vld [vmem:[%s5 + $0x2] sm:$0x1]
        %v650 = vld [vmem:[%s5 + $0x3] sm:$0x1]
        %v655 = vperm.slane %v647, 0
        %v656 = vperm.slane %v648, 0
        %v657 = vperm.slane %v649, 0
        %v658 = vperm.slane %v650, 0
        %v664 = vsel %vm590, %v630, 0
        %666 = vmatpush.msra.mxu0 0.0
        %667 = vmatpush.msra.mxu0 0.0
        %668 = vmatpush.msra.mxu0 0.0
        %669 = vmatpush.msra.mxu0 0.0
        %670 = vmatpush.msra.mxu0 0.0
        %671 = vmatpush.msra.mxu0 0.0
        %672 = vmatpush.msra.mxu0 0.0
        %673 = vmatpush.msra.mxu0 0.0
        %674 = vmatpush.msra.mxu0 0.0
        %675 = vmatpush.msra.mxu0 0.0
        %676 = vmatpush.msra.mxu0 0.0
        %677 = vmatpush.msra.mxu0 0.0
        %678 = vmatpush.msra.mxu0 %v634
        %679 = vmatpush.msra.mxu0 %v633
        %680 = vmatpush.msra.mxu0 %v632
        %681 = vmatpush.msra.mxu0 %v631
        %682 = vmatmul.f32.gmra.mxu0 %v664
        %v683 = vpop.f32.mrf.mxu0
        %v684 = vadd.f32 %v655, %v683
        %685 = vdwg.mxu0
        %686 = vmatpush.msra.mxu0 0.0
        %687 = vmatpush.msra.mxu0 0.0
        %688 = vmatpush.msra.mxu0 0.0
        %689 = vmatpush.msra.mxu0 0.0
        %690 = vmatpush.msra.mxu0 0.0
        %691 = vmatpush.msra.mxu0 0.0
        %692 = vmatpush.msra.mxu0 0.0
        %693 = vmatpush.msra.mxu0 0.0
        %694 = vmatpush.msra.mxu0 0.0
        %695 = vmatpush.msra.mxu0 0.0
        %696 = vmatpush.msra.mxu0 0.0
        %697 = vmatpush.msra.mxu0 0.0
        %698 = vmatpush.msra.mxu0 %v638
        %699 = vmatpush.msra.mxu0 %v637
        %700 = vmatpush.msra.mxu0 %v636
        %701 = vmatpush.msra.mxu0 %v635
        %702 = vmatmul.f32.gmra.mxu0 %v664
        %v703 = vpop.f32.mrf.mxu0
        %v704 = vadd.f32 %v656, %v703
        %705 = vdwg.mxu0
        %706 = vmatpush.msra.mxu0 0.0
        %707 = vmatpush.msra.mxu0 0.0
        %708 = vmatpush.msra.mxu0 0.0
        %709 = vmatpush.msra.mxu0 0.0
        %710 = vmatpush.msra.mxu0 0.0
        %711 = vmatpush.msra.mxu0 0.0
        %712 = vmatpush.msra.mxu0 0.0
        %713 = vmatpush.msra.mxu0 0.0
        %714 = vmatpush.msra.mxu0 0.0
        %715 = vmatpush.msra.mxu0 0.0
        %716 = vmatpush.msra.mxu0 0.0
        %717 = vmatpush.msra.mxu0 0.0
        %718 = vmatpush.msra.mxu0 %v642
        %719 = vmatpush.msra.mxu0 %v641
        %720 = vmatpush.msra.mxu0 %v640
        %721 = vmatpush.msra.mxu0 %v639
        %722 = vmatmul.f32.gmra.mxu0 %v664
        %v723 = vpop.f32.mrf.mxu0
        %v724 = vadd.f32 %v657, %v723
        %725 = vdwg.mxu0
        %726 = vmatpush.msra.mxu0 0.0
        %727 = vmatpush.msra.mxu0 0.0
        %728 = vmatpush.msra.mxu0 0.0
        %729 = vmatpush.msra.mxu0 0.0
        %730 = vmatpush.msra.mxu0 0.0
        %731 = vmatpush.msra.mxu0 0.0
        %732 = vmatpush.msra.mxu0 0.0
        %733 = vmatpush.msra.mxu0 0.0
        %734 = vmatpush.msra.mxu0 0.0
        %735 = vmatpush.msra.mxu0 0.0
        %736 = vmatpush.msra.mxu0 0.0
        %737 = vmatpush.msra.mxu0 0.0
        %738 = vmatpush.msra.mxu0 %v646
        %739 = vmatpush.msra.mxu0 %v645
        %740 = vmatpush.msra.mxu0 %v644
        %741 = vmatpush.msra.mxu0 %v643
        %742 = vmatmul.f32.gmra.mxu0 %v664
        %v743 = vpop.f32.mrf.mxu0
        %v744 = vadd.f32 %v658, %v743
        %745 = vdwg.mxu0
        %v746 = vld [vmem:[%s6] sm:$0xff]
        %v747 = vld [vmem:[%s6 + $0x8] sm:$0xff]
        %v748 = vld [vmem:[%s6 + $0x10] sm:$0xff]
        %v749 = vld [vmem:[%s6 + $0x18] sm:$0xff]
        %v750 = vld [vmem:[%s6 + $0x20] sm:$0xff]
        %v751 = vld [vmem:[%s6 + $0x28] sm:$0xff]
        %v752 = vld [vmem:[%s6 + $0x30] sm:$0xff]
        %v753 = vld [vmem:[%s6 + $0x38] sm:$0xff]
        %v754 = vld [vmem:[%s6 + $0x40] sm:$0xff]
        %v755 = vld [vmem:[%s6 + $0x48] sm:$0xff]
        %v756 = vld [vmem:[%s6 + $0x50] sm:$0xff]
        %v757 = vld [vmem:[%s6 + $0x58] sm:$0xff]
        %v758 = vld [vmem:[%s6 + $0x60] sm:$0xff]
        %v759 = vld [vmem:[%s6 + $0x68] sm:$0xff]
        %v760 = vld [vmem:[%s6 + $0x70] sm:$0xff]
        %v761 = vld [vmem:[%s6 + $0x78] sm:$0xff]
        %v762 = vld [vmem:[%s7] sm:$0x1]
        %v763 = vld [vmem:[%s7 + $0x1] sm:$0x1]
        %v764 = vld [vmem:[%s7 + $0x2] sm:$0x1]
        %v765 = vld [vmem:[%s7 + $0x3] sm:$0x1]
        %v770 = vperm.slane %v762, 0
        %v771 = vperm.slane %v763, 0
        %v772 = vperm.slane %v764, 0
        %v773 = vperm.slane %v765, 0
        %778 = vmatpush.msra.mxu0 0.0
        %779 = vmatpush.msra.mxu0 0.0
        %780 = vmatpush.msra.mxu0 0.0
        %781 = vmatpush.msra.mxu0 0.0
        %782 = vmatpush.msra.mxu0 0.0
        %783 = vmatpush.msra.mxu0 0.0
        %784 = vmatpush.msra.mxu0 0.0
        %785 = vmatpush.msra.mxu0 0.0
        %786 = vmatpush.msra.mxu0 0.0
        %787 = vmatpush.msra.mxu0 0.0
        %788 = vmatpush.msra.mxu0 0.0
        %789 = vmatpush.msra.mxu0 0.0
        %790 = vmatpush.msra.mxu0 %v749
        %791 = vmatpush.msra.mxu0 %v748
        %792 = vmatpush.msra.mxu0 %v747
        %793 = vmatpush.msra.mxu0 %v746
        %794 = vmatmul.f32.gmra.mxu0 %v664
        %v795 = vpop.f32.mrf.mxu0
        %v796 = vadd.f32 %v770, %v795
        %797 = vdwg.mxu0
        %798 = vmatpush.msra.mxu0 0.0
        %799 = vmatpush.msra.mxu0 0.0
        %800 = vmatpush.msra.mxu0 0.0
        %801 = vmatpush.msra.mxu0 0.0
        %802 = vmatpush.msra.mxu0 0.0
        %803 = vmatpush.msra.mxu0 0.0
        %804 = vmatpush.msra.mxu0 0.0
        %805 = vmatpush.msra.mxu0 0.0
        %806 = vmatpush.msra.mxu0 0.0
        %807 = vmatpush.msra.mxu0 0.0
        %808 = vmatpush.msra.mxu0 0.0
        %809 = vmatpush.msra.mxu0 0.0
        %810 = vmatpush.msra.mxu0 %v753
        %811 = vmatpush.msra.mxu0 %v752
        %812 = vmatpush.msra.mxu0 %v751
        %813 = vmatpush.msra.mxu0 %v750
        %814 = vmatmul.f32.gmra.mxu0 %v664
        %v815 = vpop.f32.mrf.mxu0
        %v816 = vadd.f32 %v771, %v815
        %817 = vdwg.mxu0
        %818 = vmatpush.msra.mxu0 0.0
        %819 = vmatpush.msra.mxu0 0.0
        %820 = vmatpush.msra.mxu0 0.0
        %821 = vmatpush.msra.mxu0 0.0
        %822 = vmatpush.msra.mxu0 0.0
        %823 = vmatpush.msra.mxu0 0.0
        %824 = vmatpush.msra.mxu0 0.0
        %825 = vmatpush.msra.mxu0 0.0
        %826 = vmatpush.msra.mxu0 0.0
        %827 = vmatpush.msra.mxu0 0.0
        %828 = vmatpush.msra.mxu0 0.0
        %829 = vmatpush.msra.mxu0 0.0
        %830 = vmatpush.msra.mxu0 %v757
        %831 = vmatpush.msra.mxu0 %v756
        %832 = vmatpush.msra.mxu0 %v755
        %833 = vmatpush.msra.mxu0 %v754
        %834 = vmatmul.f32.gmra.mxu0 %v664
        %v835 = vpop.f32.mrf.mxu0
        %v836 = vadd.f32 %v772, %v835
        %837 = vdwg.mxu0
        %838 = vmatpush.msra.mxu0 0.0
        %839 = vmatpush.msra.mxu0 0.0
        %840 = vmatpush.msra.mxu0 0.0
        %841 = vmatpush.msra.mxu0 0.0
        %842 = vmatpush.msra.mxu0 0.0
        %843 = vmatpush.msra.mxu0 0.0
        %844 = vmatpush.msra.mxu0 0.0
        %845 = vmatpush.msra.mxu0 0.0
        %846 = vmatpush.msra.mxu0 0.0
        %847 = vmatpush.msra.mxu0 0.0
        %848 = vmatpush.msra.mxu0 0.0
        %849 = vmatpush.msra.mxu0 0.0
        %850 = vmatpush.msra.mxu0 %v761
        %851 = vmatpush.msra.mxu0 %v760
        %852 = vmatpush.msra.mxu0 %v759
        %853 = vmatpush.msra.mxu0 %v758
        %854 = vmatmul.f32.gmra.mxu0 %v664
        %v855 = vpop.f32.mrf.mxu0
        %v856 = vadd.f32 %v773, %v855
        %857 = vdwg.mxu0
        %v858 = vld [vmem:[%s8] sm:$0xff]
        %v859 = vld [vmem:[%s8 + $0x8] sm:$0xff]
        %v860 = vld [vmem:[%s8 + $0x10] sm:$0xff]
        %v861 = vld [vmem:[%s8 + $0x18] sm:$0xff]
        %v862 = vld [vmem:[%s8 + $0x20] sm:$0xff]
        %v863 = vld [vmem:[%s8 + $0x28] sm:$0xff]
        %v864 = vld [vmem:[%s8 + $0x30] sm:$0xff]
        %v865 = vld [vmem:[%s8 + $0x38] sm:$0xff]
        %v866 = vld [vmem:[%s8 + $0x40] sm:$0xff]
        %v867 = vld [vmem:[%s8 + $0x48] sm:$0xff]
        %v868 = vld [vmem:[%s8 + $0x50] sm:$0xff]
        %v869 = vld [vmem:[%s8 + $0x58] sm:$0xff]
        %v870 = vld [vmem:[%s8 + $0x60] sm:$0xff]
        %v871 = vld [vmem:[%s8 + $0x68] sm:$0xff]
        %v872 = vld [vmem:[%s8 + $0x70] sm:$0xff]
        %v873 = vld [vmem:[%s8 + $0x78] sm:$0xff]
        %v874 = vld [vmem:[%s9] sm:$0x1]
        %v875 = vld [vmem:[%s9 + $0x1] sm:$0x1]
        %v876 = vld [vmem:[%s9 + $0x2] sm:$0x1]
        %v877 = vld [vmem:[%s9 + $0x3] sm:$0x1]
        %v882 = vperm.slane %v874, 0
        %v883 = vperm.slane %v875, 0
        %v884 = vperm.slane %v876, 0
        %v885 = vperm.slane %v877, 0
        %890 = vmatpush.msra.mxu0 0.0
        %891 = vmatpush.msra.mxu0 0.0
        %892 = vmatpush.msra.mxu0 0.0
        %893 = vmatpush.msra.mxu0 0.0
        %894 = vmatpush.msra.mxu0 0.0
        %895 = vmatpush.msra.mxu0 0.0
        %896 = vmatpush.msra.mxu0 0.0
        %897 = vmatpush.msra.mxu0 0.0
        %898 = vmatpush.msra.mxu0 0.0
        %899 = vmatpush.msra.mxu0 0.0
        %900 = vmatpush.msra.mxu0 0.0
        %901 = vmatpush.msra.mxu0 0.0
        %902 = vmatpush.msra.mxu0 %v861
        %903 = vmatpush.msra.mxu0 %v860
        %904 = vmatpush.msra.mxu0 %v859
        %905 = vmatpush.msra.mxu0 %v858
        %906 = vmatmul.f32.gmra.mxu0 %v664
        %v907 = vpop.f32.mrf.mxu0
        %v908 = vadd.f32 %v882, %v907
        %909 = vdwg.mxu0
        %910 = vmatpush.msra.mxu0 0.0
        %911 = vmatpush.msra.mxu0 0.0
        %912 = vmatpush.msra.mxu0 0.0
        %913 = vmatpush.msra.mxu0 0.0
        %914 = vmatpush.msra.mxu0 0.0
        %915 = vmatpush.msra.mxu0 0.0
        %916 = vmatpush.msra.mxu0 0.0
        %917 = vmatpush.msra.mxu0 0.0
        %918 = vmatpush.msra.mxu0 0.0
        %919 = vmatpush.msra.mxu0 0.0
        %920 = vmatpush.msra.mxu0 0.0
        %921 = vmatpush.msra.mxu0 0.0
        %922 = vmatpush.msra.mxu0 %v865
        %923 = vmatpush.msra.mxu0 %v864
        %924 = vmatpush.msra.mxu0 %v863
        %925 = vmatpush.msra.mxu0 %v862
        %926 = vmatmul.f32.gmra.mxu0 %v664
        %v927 = vpop.f32.mrf.mxu0
        %v928 = vadd.f32 %v883, %v927
        %929 = vdwg.mxu0
        %930 = vmatpush.msra.mxu0 0.0
        %931 = vmatpush.msra.mxu0 0.0
        %932 = vmatpush.msra.mxu0 0.0
        %933 = vmatpush.msra.mxu0 0.0
        %934 = vmatpush.msra.mxu0 0.0
        %935 = vmatpush.msra.mxu0 0.0
        %936 = vmatpush.msra.mxu0 0.0
        %937 = vmatpush.msra.mxu0 0.0
        %938 = vmatpush.msra.mxu0 0.0
        %939 = vmatpush.msra.mxu0 0.0
        %940 = vmatpush.msra.mxu0 0.0
        %941 = vmatpush.msra.mxu0 0.0
        %942 = vmatpush.msra.mxu0 %v869
        %943 = vmatpush.msra.mxu0 %v868
        %944 = vmatpush.msra.mxu0 %v867
        %945 = vmatpush.msra.mxu0 %v866
        %946 = vmatmul.f32.gmra.mxu0 %v664
        %v947 = vpop.f32.mrf.mxu0
        %v948 = vadd.f32 %v884, %v947
        %949 = vdwg.mxu0
        %950 = vmatpush.msra.mxu0 0.0
        %951 = vmatpush.msra.mxu0 0.0
        %952 = vmatpush.msra.mxu0 0.0
        %953 = vmatpush.msra.mxu0 0.0
        %954 = vmatpush.msra.mxu0 0.0
        %955 = vmatpush.msra.mxu0 0.0
        %956 = vmatpush.msra.mxu0 0.0
        %957 = vmatpush.msra.mxu0 0.0
        %958 = vmatpush.msra.mxu0 0.0
        %959 = vmatpush.msra.mxu0 0.0
        %960 = vmatpush.msra.mxu0 0.0
        %961 = vmatpush.msra.mxu0 0.0
        %962 = vmatpush.msra.mxu0 %v873
        %963 = vmatpush.msra.mxu0 %v872
        %964 = vmatpush.msra.mxu0 %v871
        %965 = vmatpush.msra.mxu0 %v870
        %966 = vmatmul.f32.gmra.mxu0 %v664
        %v967 = vpop.f32.mrf.mxu0
        %v968 = vadd.f32 %v885, %v967
        %969 = vdwg.mxu0
        %vm970 = vcmask 64512
        %v972 = vsel %vm970, %v684, 0
        %v975 = vsel %vm970, %v796, 0
        %977 = vmatpush.xpose.msra.mxu0 0.0
        %978 = vmatpush.xpose.msra.mxu0 0.0
        %979 = vmatpush.xpose.msra.mxu0 0.0
        %980 = vmatpush.xpose.msra.mxu0 0.0
        %981 = vmatpush.xpose.msra.mxu0 0.0
        %982 = vmatpush.xpose.msra.mxu0 0.0
        %983 = vmatpush.xpose.msra.mxu0 0.0
        %984 = vmatpush.xpose.msra.mxu0 0.0
        %985 = vmatpush.xpose.msra.mxu0 0.0
        %986 = vmatpush.xpose.msra.mxu0 0.0
        %987 = vmatpush.xpose.msra.mxu0 0.0
        %988 = vmatpush.xpose.msra.mxu0 0.0
        %989 = vmatpush.xpose.msra.mxu0 0.0
        %990 = vmatpush.xpose.msra.mxu0 0.0
        %991 = vmatpush.xpose.msra.mxu0 0.0
        %992 = vmatpush.xpose.msra.mxu0 %v975
        %993 = vmatmul.f32.gmra.mxu0 %v972
        %v994 = vpop.f32.mrf.mxu0
        %v995 = vadd.f32 0.0, %v994
        %996 = vdwg.mxu0
        %v998 = vsel %vm970, %v704, 0
        %v1001 = vsel %vm970, %v816, 0
        %1003 = vmatpush.xpose.msra.mxu0 0.0
        %1004 = vmatpush.xpose.msra.mxu0 0.0
        %1005 = vmatpush.xpose.msra.mxu0 0.0
        %1006 = vmatpush.xpose.msra.mxu0 0.0
        %1007 = vmatpush.xpose.msra.mxu0 0.0
        %1008 = vmatpush.xpose.msra.mxu0 0.0
        %1009 = vmatpush.xpose.msra.mxu0 0.0
        %1010 = vmatpush.xpose.msra.mxu0 0.0
        %1011 = vmatpush.xpose.msra.mxu0 0.0
        %1012 = vmatpush.xpose.msra.mxu0 0.0
        %1013 = vmatpush.xpose.msra.mxu0 0.0
        %1014 = vmatpush.xpose.msra.mxu0 0.0
        %1015 = vmatpush.xpose.msra.mxu0 0.0
        %1016 = vmatpush.xpose.msra.mxu0 0.0
        %1017 = vmatpush.xpose.msra.mxu0 0.0
        %1018 = vmatpush.xpose.msra.mxu0 %v1001
        %1019 = vmatmul.f32.gmra.mxu0 %v998
        %v1020 = vpop.f32.mrf.mxu0
        %v1021 = vadd.f32 0.0, %v1020
        %1022 = vdwg.mxu0
        %v1024 = vsel %vm970, %v724, 0
        %v1027 = vsel %vm970, %v836, 0
        %1029 = vmatpush.xpose.msra.mxu0 0.0
        %1030 = vmatpush.xpose.msra.mxu0 0.0
        %1031 = vmatpush.xpose.msra.mxu0 0.0
        %1032 = vmatpush.xpose.msra.mxu0 0.0
        %1033 = vmatpush.xpose.msra.mxu0 0.0
        %1034 = vmatpush.xpose.msra.mxu0 0.0
        %1035 = vmatpush.xpose.msra.mxu0 0.0
        %1036 = vmatpush.xpose.msra.mxu0 0.0
        %1037 = vmatpush.xpose.msra.mxu0 0.0
        %1038 = vmatpush.xpose.msra.mxu0 0.0
        %1039 = vmatpush.xpose.msra.mxu0 0.0
        %1040 = vmatpush.xpose.msra.mxu0 0.0
        %1041 = vmatpush.xpose.msra.mxu0 0.0
        %1042 = vmatpush.xpose.msra.mxu0 0.0
        %1043 = vmatpush.xpose.msra.mxu0 0.0
        %1044 = vmatpush.xpose.msra.mxu0 %v1027
        %1045 = vmatmul.f32.gmra.mxu0 %v1024
        %v1046 = vpop.f32.mrf.mxu0
        %v1047 = vadd.f32 0.0, %v1046
        %1048 = vdwg.mxu0
        %v1050 = vsel %vm970, %v744, 0
        %v1053 = vsel %vm970, %v856, 0
        %1055 = vmatpush.xpose.msra.mxu0 0.0
        %1056 = vmatpush.xpose.msra.mxu0 0.0
        %1057 = vmatpush.xpose.msra.mxu0 0.0
        %1058 = vmatpush.xpose.msra.mxu0 0.0
        %1059 = vmatpush.xpose.msra.mxu0 0.0
        %1060 = vmatpush.xpose.msra.mxu0 0.0
        %1061 = vmatpush.xpose.msra.mxu0 0.0
        %1062 = vmatpush.xpose.msra.mxu0 0.0
        %1063 = vmatpush.xpose.msra.mxu0 0.0
        %1064 = vmatpush.xpose.msra.mxu0 0.0
        %1065 = vmatpush.xpose.msra.mxu0 0.0
        %1066 = vmatpush.xpose.msra.mxu0 0.0
        %1067 = vmatpush.xpose.msra.mxu0 0.0
        %1068 = vmatpush.xpose.msra.mxu0 0.0
        %1069 = vmatpush.xpose.msra.mxu0 0.0
        %1070 = vmatpush.xpose.msra.mxu0 %v1053
        %1071 = vmatmul.f32.gmra.mxu0 %v1050
        %v1072 = vpop.f32.mrf.mxu0
        %v1073 = vadd.f32 0.0, %v1072
        %1074 = vdwg.mxu0
        %v1075 = vmul.f32 %v995, 0.35355338
        %v1076 = vmul.f32 %v1021, 0.35355338
        %v1077 = vmul.f32 %v1047, 0.35355338
        %v1078 = vmul.f32 %v1073, 0.35355338
        %v1079 = vsel %vm587, 1, 0
        %v1080 = vperm.slane %v1079, 0
        %vm1081 = vcmp.eq.s32.totalorder %v1080, 1
        %v1082 = vsel %vm1081, -1e+09, %v1075
        %v1083 = vsel %vm1081, -1e+09, %v1076
        %v1084 = vsel %vm1081, -1e+09, %v1077
        %v1085 = vsel %vm1081, -1e+09, %v1078
        %v1086 = vsel %vm970, %v1082, -inf
        %1087 = vmax.xlane.f32.xlu0 %v1086
        %v1088 = vpop.xlane.xlu0 %1087
        %v1089 = vsel %vm970, %v1083, -inf
        %1090 = vmax.xlane.f32.xlu0 %v1089
        %v1091 = vpop.xlane.xlu0 %1090
        %v1092 = vsel %vm970, %v1084, -inf
        %1093 = vmax.xlane.f32.xlu0 %v1092
        %v1094 = vpop.xlane.xlu0 %1093
        %v1095 = vsel %vm970, %v1085, -inf
        %1096 = vmax.xlane.f32.xlu0 %v1095
        %v1097 = vpop.xlane.xlu0 %1096
        %v1098 = vsub.f32 %v1082, %v1088
        %v1099 = vsub.f32 %v1083, %v1091
        %v1100 = vsub.f32 %v1084, %v1094
        %v1101 = vsub.f32 %v1085, %v1097
        %v1102 = vmul.f32 %v1098, 1.442695
        %v1103 = vpow.pop %v1102
        %v1104 = vmul.f32 %v1099, 1.442695
        %v1105 = vpow.pop %v1104
        %v1106 = vmul.f32 %v1100, 1.442695
        %v1107 = vpow.pop %v1106
        %v1108 = vmul.f32 %v1101, 1.442695
        %v1109 = vpow.pop %v1108
        %v1110 = vsel %vm970, %v1103, 0.0
        %1111 = vadd.xlane.f32.xlu0 %v1110
        %v1112 = vpop.xlane.xlu0 %1111
        %v1113 = vsel %vm970, %v1105, 0.0
        %1114 = vadd.xlane.f32.xlu0 %v1113
        %v1115 = vpop.xlane.xlu0 %1114
        %v1116 = vsel %vm970, %v1107, 0.0
        %1117 = vadd.xlane.f32.xlu0 %v1116
        %v1118 = vpop.xlane.xlu0 %1117
        %v1119 = vsel %vm970, %v1109, 0.0
        %1120 = vadd.xlane.f32.xlu0 %v1119
        %v1121 = vpop.xlane.xlu0 %1120
        %v1122 = vrcp.pop %v1112
        %v1123 = vrcp.pop %v1115
        %v1124 = vrcp.pop %v1118
        %v1125 = vrcp.pop %v1121
        %v1126 = vmul.f32 %v1103, %v1122
        %v1127 = vmul.f32 %v1105, %v1123
        %v1128 = vmul.f32 %v1107, %v1124
        %v1129 = vmul.f32 %v1109, %v1125
        %v1131 = vsel %vm970, %v1126, 0
        %1133 = vmatpush.msra.mxu0 0.0
        %1134 = vmatpush.msra.mxu0 0.0
        %1135 = vmatpush.msra.mxu0 0.0
        %1136 = vmatpush.msra.mxu0 0.0
        %1137 = vmatpush.msra.mxu0 0.0
        %1138 = vmatpush.msra.mxu0 0.0
        %1139 = vmatpush.msra.mxu0 0.0
        %1140 = vmatpush.msra.mxu0 0.0
        %1141 = vmatpush.msra.mxu0 0.0
        %1142 = vmatpush.msra.mxu0 0.0
        %1143 = vmatpush.msra.mxu0 0.0
        %1144 = vmatpush.msra.mxu0 0.0
        %1145 = vmatpush.msra.mxu0 0.0
        %1146 = vmatpush.msra.mxu0 0.0
        %1147 = vmatpush.msra.mxu0 0.0
        %1148 = vmatpush.msra.mxu0 %v908
        %1149 = vmatmul.f32.gmra.mxu0 %v1131
        %v1150 = vpop.f32.mrf.mxu0
        %v1151 = vadd.f32 0.0, %v1150
        %1152 = vdwg.mxu0
        %v1154 = vsel %vm970, %v1127, 0
        %1156 = vmatpush.msra.mxu0 0.0
        %1157 = vmatpush.msra.mxu0 0.0
        %1158 = vmatpush.msra.mxu0 0.0
        %1159 = vmatpush.msra.mxu0 0.0
        %1160 = vmatpush.msra.mxu0 0.0
        %1161 = vmatpush.msra.mxu0 0.0
        %1162 = vmatpush.msra.mxu0 0.0
        %1163 = vmatpush.msra.mxu0 0.0
        %1164 = vmatpush.msra.mxu0 0.0
        %1165 = vmatpush.msra.mxu0 0.0
        %1166 = vmatpush.msra.mxu0 0.0
        %1167 = vmatpush.msra.mxu0 0.0
        %1168 = vmatpush.msra.mxu0 0.0
        %1169 = vmatpush.msra.mxu0 0.0
        %1170 = vmatpush.msra.mxu0 0.0
        %1171 = vmatpush.msra.mxu0 %v928
        %1172 = vmatmul.f32.gmra.mxu0 %v1154
        %v1173 = vpop.f32.mrf.mxu0
        %v1174 = vadd.f32 0.0, %v1173
        %1175 = vdwg.mxu0
        %v1177 = vsel %vm970, %v1128, 0
        %1179 = vmatpush.msra.mxu0 0.0
        %1180 = vmatpush.msra.mxu0 0.0
        %1181 = vmatpush.msra.mxu0 0.0
        %1182 = vmatpush.msra.mxu0 0.0
        %1183 = vmatpush.msra.mxu0 0.0
        %1184 = vmatpush.msra.mxu0 0.0
        %1185 = vmatpush.msra.mxu0 0.0
        %1186 = vmatpush.msra.mxu0 0.0
        %1187 = vmatpush.msra.mxu0 0.0
        %1188 = vmatpush.msra.mxu0 0.0
        %1189 = vmatpush.msra.mxu0 0.0
        %1190 = vmatpush.msra.mxu0 0.0
        %1191 = vmatpush.msra.mxu0 0.0
        %1192 = vmatpush.msra.mxu0 0.0
        %1193 = vmatpush.msra.mxu0 0.0
        %1194 = vmatpush.msra.mxu0 %v948
        %1195 = vmatmul.f32.gmra.mxu0 %v1177
        %v1196 = vpop.f32.mrf.mxu0
        %v1197 = vadd.f32 0.0, %v1196
        %1198 = vdwg.mxu0
        %v1200 = vsel %vm970, %v1129, 0
        %1202 = vmatpush.msra.mxu0 0.0
        %1203 = vmatpush.msra.mxu0 0.0
        %1204 = vmatpush.msra.mxu0 0.0
        %1205 = vmatpush.msra.mxu0 0.0
        %1206 = vmatpush.msra.mxu0 0.0
        %1207 = vmatpush.msra.mxu0 0.0
        %1208 = vmatpush.msra.mxu0 0.0
        %1209 = vmatpush.msra.mxu0 0.0
        %1210 = vmatpush.msra.mxu0 0.0
        %1211 = vmatpush.msra.mxu0 0.0
        %1212 = vmatpush.msra.mxu0 0.0
        %1213 = vmatpush.msra.mxu0 0.0
        %1214 = vmatpush.msra.mxu0 0.0
        %1215 = vmatpush.msra.mxu0 0.0
        %1216 = vmatpush.msra.mxu0 0.0
        %1217 = vmatpush.msra.mxu0 %v968
        %1218 = vmatmul.f32.gmra.mxu0 %v1200
        %v1219 = vpop.f32.mrf.mxu0
        %v1220 = vadd.f32 0.0, %v1219
        %1221 = vdwg.mxu0
        %v1222 = vld [vmem:[%s10] sm:$0xff]
        %v1223 = vld [vmem:[%s10 + $0x8] sm:$0xff]
        %v1224 = vld [vmem:[%s10 + $0x10] sm:$0xff]
        %v1225 = vld [vmem:[%s10 + $0x18] sm:$0xff]
        %v1227 = vsel %vm970, %v1151, 0
        %1229 = vmatpush.msra.mxu0 0.0
        %1230 = vmatpush.msra.mxu0 0.0
        %1231 = vmatpush.msra.mxu0 0.0
        %1232 = vmatpush.msra.mxu0 0.0
        %1233 = vmatpush.msra.mxu0 0.0
        %1234 = vmatpush.msra.mxu0 0.0
        %1235 = vmatpush.msra.mxu0 0.0
        %1236 = vmatpush.msra.mxu0 0.0
        %1237 = vmatpush.msra.mxu0 0.0
        %1238 = vmatpush.msra.mxu0 0.0
        %1239 = vmatpush.msra.mxu0 0.0
        %1240 = vmatpush.msra.mxu0 0.0
        %1241 = vmatpush.msra.mxu0 0.0
        %1242 = vmatpush.msra.mxu0 0.0
        %1243 = vmatpush.msra.mxu0 0.0
        %1244 = vmatpush.msra.mxu0 %v1222
        %1245 = vmatmul.f32.gmra.mxu0 %v1227
        %v1246 = vpop.f32.mrf.mxu0
        %v1247 = vadd.f32 0.0, %v1246
        %1248 = vdwg.mxu0
        %v1250 = vsel %vm970, %v1174, 0
        %1252 = vmatpush.msra.mxu0 0.0
        %1253 = vmatpush.msra.mxu0 0.0
        %1254 = vmatpush.msra.mxu0 0.0
        %1255 = vmatpush.msra.mxu0 0.0
        %1256 = vmatpush.msra.mxu0 0.0
        %1257 = vmatpush.msra.mxu0 0.0
        %1258 = vmatpush.msra.mxu0 0.0
        %1259 = vmatpush.msra.mxu0 0.0
        %1260 = vmatpush.msra.mxu0 0.0
        %1261 = vmatpush.msra.mxu0 0.0
        %1262 = vmatpush.msra.mxu0 0.0
        %1263 = vmatpush.msra.mxu0 0.0
        %1264 = vmatpush.msra.mxu0 0.0
        %1265 = vmatpush.msra.mxu0 0.0
        %1266 = vmatpush.msra.mxu0 0.0
        %1267 = vmatpush.msra.mxu0 %v1223
        %1268 = vmatmul.f32.gmra.mxu0 %v1250
        %v1269 = vpop.f32.mrf.mxu0
        %v1270 = vadd.f32 0.0, %v1269
        %1271 = vdwg.mxu0
        %v1273 = vsel %vm970, %v1197, 0
        %1275 = vmatpush.msra.mxu0 0.0
        %1276 = vmatpush.msra.mxu0 0.0
        %1277 = vmatpush.msra.mxu0 0.0
        %1278 = vmatpush.msra.mxu0 0.0
        %1279 = vmatpush.msra.mxu0 0.0
        %1280 = vmatpush.msra.mxu0 0.0
        %1281 = vmatpush.msra.mxu0 0.0
        %1282 = vmatpush.msra.mxu0 0.0
        %1283 = vmatpush.msra.mxu0 0.0
        %1284 = vmatpush.msra.mxu0 0.0
        %1285 = vmatpush.msra.mxu0 0.0
        %1286 = vmatpush.msra.mxu0 0.0
        %1287 = vmatpush.msra.mxu0 0.0
        %1288 = vmatpush.msra.mxu0 0.0
        %1289 = vmatpush.msra.mxu0 0.0
        %1290 = vmatpush.msra.mxu0 %v1224
        %1291 = vmatmul.f32.gmra.mxu0 %v1273
        %v1292 = vpop.f32.mrf.mxu0
        %v1293 = vadd.f32 0.0, %v1292
        %1294 = vdwg.mxu0
        %v1296 = vsel %vm970, %v1220, 0
        %1298 = vmatpush.msra.mxu0 0.0
        %1299 = vmatpush.msra.mxu0 0.0
        %1300 = vmatpush.msra.mxu0 0.0
        %1301 = vmatpush.msra.mxu0 0.0
        %1302 = vmatpush.msra.mxu0 0.0
        %1303 = vmatpush.msra.mxu0 0.0
        %1304 = vmatpush.msra.mxu0 0.0
        %1305 = vmatpush.msra.mxu0 0.0
        %1306 = vmatpush.msra.mxu0 0.0
        %1307 = vmatpush.msra.mxu0 0.0
        %1308 = vmatpush.msra.mxu0 0.0
        %1309 = vmatpush.msra.mxu0 0.0
        %1310 = vmatpush.msra.mxu0 0.0
        %1311 = vmatpush.msra.mxu0 0.0
        %1312 = vmatpush.msra.mxu0 0.0
        %1313 = vmatpush.msra.mxu0 %v1225
        %1314 = vmatmul.f32.gmra.mxu0 %v1296
        %v1315 = vpop.f32.mrf.mxu0
        %v1316 = vadd.f32 0.0, %v1315
        %1317 = vdwg.mxu0
        %v1318 = vsel %vm590, %v1247, 0.0
        %v1319 = vsel %vm590, %v1270, 0.0
        %v1320 = vadd.f32 %v1318, %v1319
        %v1321 = vsel %vm590, %v1293, 0.0
        %v1322 = vadd.f32 %v1320, %v1321
        %v1323 = vsel %vm590, %v1316, 0.0
        %v1324 = vadd.f32 %v1322, %v1323
        %v1325 = vadd.f32 %v585, %v1324
        %v1326 = vld [vmem:[%s11] sm:$0x1]
        %v1328 = vperm.slane %v1326, 0
        %v1330 = vadd.f32 %v1325, %v1328
        %v1331 = vld [vmem:[%s12] sm:$0x1]
        %v1332 = vld [vmem:[%s13] sm:$0x1]
        %v1333 = vsel %vm590, %v1330, 0.0
        %1334 = vadd.xlane.f32.xlu0 %v1333
        %v1335 = vpop.xlane.xlu0 %1334
        %v1336 = vmul.f32 %v1335, %v600
        %v1337 = vsub.f32 %v1330, %v1336
        %v1338 = vmul.f32 %v1337, %v1337
        %v1339 = vsel %vm590, %v1338, 0.0
        %1340 = vadd.xlane.f32.xlu0 %v1339
        %v1341 = vpop.xlane.xlu0 %1340
        %v1342 = vmul.f32 %v1341, 0.032258064
        %v1343 = vrsqrt.pop %v1342
        %v1344 = vmul.f32 %v1343, %v1342
        %v1345 = vmul.f32 %v1344, %v1343
        %v1346 = vmul.f32 0.5, %v1345
        %v1347 = vsub.f32 1.5, %v1346
        %v1348 = vmul.f32 %v1343, %v1347
        %v1349 = vmul.f32 %v1342, %v1348
        %vm1350 = vcmp.eq.f32.partialorder %v1342, inf
        %v1351 = vsel %vm1350, %v1342, %v1349
        %vm1352 = vcmp.eq.f32.partialorder %v1342, 0.0
        %v1353 = vand.u32 %v1342, 2147483648
        %v1354 = vsel %vm1352, %v1353, %v1351
        %v1355 = vadd.f32 %v1354, 1e-06
        %v1356 = vrcp.pop %v1355
        %v1358 = vperm.slane %v1331, 0
        %v1360 = vmul.f32 %v1358, %v1337
        %v1361 = vmul.f32 %v1360, %v1356
        %v1363 = vperm.slane %v1332, 0
        %v1365 = vadd.f32 %v1361, %v1363
        %v1366 = vld [vmem:[%s14] sm:$0xff]
        %v1367 = vld [vmem:[%s14 + $0x8] sm:$0xff]
        %v1368 = vld [vmem:[%s14 + $0x10] sm:$0xff]
        %v1369 = vld [vmem:[%s14 + $0x18] sm:$0xff]
        %v1370 = vld [vmem:[%s15] sm:$0x1]
        %v1372 = vperm.slane %v1370, 0
        %v1375 = vsel %vm590, %v1365, 0
        %1377 = vmatpush.msra.mxu0 0.0
        %1378 = vmatpush.msra.mxu0 0.0
        %1379 = vmatpush.msra.mxu0 0.0
        %1380 = vmatpush.msra.mxu0 0.0
        %1381 = vmatpush.msra.mxu0 0.0
        %1382 = vmatpush.msra.mxu0 0.0
        %1383 = vmatpush.msra.mxu0 0.0
        %1384 = vmatpush.msra.mxu0 0.0
        %1385 = vmatpush.msra.mxu0 0.0
        %1386 = vmatpush.msra.mxu0 0.0
        %1387 = vmatpush.msra.mxu0 0.0
        %1388 = vmatpush.msra.mxu0 0.0
        %1389 = vmatpush.msra.mxu0 %v1369
        %1390 = vmatpush.msra.mxu0 %v1368
        %1391 = vmatpush.msra.mxu0 %v1367
        %1392 = vmatpush.msra.mxu0 %v1366
        %1393 = vmatmul.f32.gmra.mxu0 %v1375
        %v1394 = vpop.f32.mrf.mxu0
        %v1395 = vadd.f32 %v1372, %v1394
        %1396 = vdwg.mxu0
        %v1397 = vmax.f32 %v1395, 0.0
        %v1398 = vld [vmem:[%s16] sm:$0xff]
        %v1399 = vld [vmem:[%s16 + $0x8] sm:$0xff]
        %v1400 = vld [vmem:[%s16 + $0x10] sm:$0xff]
        %v1401 = vld [vmem:[%s16 + $0x18] sm:$0xff]
        %v1402 = vld [vmem:[%s16 + $0x20] sm:$0xff]
        %v1403 = vld [vmem:[%s16 + $0x28] sm:$0xff]
        %v1404 = vld [vmem:[%s16 + $0x30] sm:$0xff]
        %v1405 = vld [vmem:[%s16 + $0x38] sm:$0xff]
        %vm1406 = vcmask 523264
        %v1408 = vsel %vm1406, %v1397, 0
        %1410 = vmatpush.msra.mxu0 0.0
        %1411 = vmatpush.msra.mxu0 0.0
        %1412 = vmatpush.msra.mxu0 0.0
        %1413 = vmatpush.msra.mxu0 0.0
        %1414 = vmatpush.msra.mxu0 0.0
        %1415 = vmatpush.msra.mxu0 0.0
        %1416 = vmatpush.msra.mxu0 0.0
        %1417 = vmatpush.msra.mxu0 0.0
        %1418 = vmatpush.msra.mxu0 %v1405
        %1419 = vmatpush.msra.mxu0 %v1404
        %1420 = vmatpush.msra.mxu0 %v1403
        %1421 = vmatpush.msra.mxu0 %v1402
        %1422 = vmatpush.msra.mxu0 %v1401
        %1423 = vmatpush.msra.mxu0 %v1400
        %1424 = vmatpush.msra.mxu0 %v1399
        %1425 = vmatpush.msra.mxu0 %v1398
        %1426 = vmatmul.f32.gmra.mxu0 %v1408
        %v1427 = vpop.f32.mrf.mxu0
        %v1428 = vadd.f32 0.0, %v1427
        %1429 = vdwg.mxu0
        %v1430 = vadd.f32 %v1330, %v1428
        %v1431 = vld [vmem:[%s17] sm:$0x1]
        %v1433 = vperm.slane %v1431, 0
        %v1435 = vadd.f32 %v1430, %v1433
        %s1436 = scalar_lea.vmem %s2, 1
        %v1437 = vld [vmem:[%s1436] sm:$0x1]
        %s1438 = scalar_lea.vmem %s3, 1
        %v1439 = vld [vmem:[%s1438] sm:$0x1]
        %v1440 = vsel %vm590, %v1435, 0.0
        %1441 = vadd.xlane.f32.xlu0 %v1440
        %v1442 = vpop.xlane.xlu0 %1441
        %v1443 = vmul.f32 %v1442, %v600
        %v1444 = vsub.f32 %v1435, %v1443
        %v1445 = vmul.f32 %v1444, %v1444
        %v1446 = vsel %vm590, %v1445, 0.0
        %1447 = vadd.xlane.f32.xlu0 %v1446
        %v1448 = vpop.xlane.xlu0 %1447
        %v1449 = vmul.f32 %v1448, 0.032258064
        %v1450 = vrsqrt.pop %v1449
        %v1451 = vmul.f32 %v1450, %v1449
        %v1452 = vmul.f32 %v1451, %v1450
        %v1453 = vmul.f32 0.5, %v1452
        %v1454 = vsub.f32 1.5, %v1453
        %v1455 = vmul.f32 %v1450, %v1454
        %v1456 = vmul.f32 %v1449, %v1455
        %vm1457 = vcmp.eq.f32.partialorder %v1449, inf
        %v1458 = vsel %vm1457, %v1449, %v1456
        %vm1459 = vcmp.eq.f32.partialorder %v1449, 0.0
        %v1460 = vand.u32 %v1449, 2147483648
        %v1461 = vsel %vm1459, %v1460, %v1458
        %v1462 = vadd.f32 %v1461, 1e-06
        %v1463 = vrcp.pop %v1462
        %v1465 = vperm.slane %v1437, 0
        %v1467 = vmul.f32 %v1465, %v1444
        %v1468 = vmul.f32 %v1467, %v1463
        %v1470 = vperm.slane %v1439, 0
        %v1472 = vadd.f32 %v1468, %v1470
        %s1473 = scalar_lea.vmem %s4, 128
        %v1474 = vld [vmem:[%s1473] sm:$0xff]
        %v1475 = vld [vmem:[%s1473 + $0x8] sm:$0xff]
        %v1476 = vld [vmem:[%s1473 + $0x10] sm:$0xff]
        %v1477 = vld [vmem:[%s1473 + $0x18] sm:$0xff]
        %v1478 = vld [vmem:[%s1473 + $0x20] sm:$0xff]
        %v1479 = vld [vmem:[%s1473 + $0x28] sm:$0xff]
        %v1480 = vld [vmem:[%s1473 + $0x30] sm:$0xff]
        %v1481 = vld [vmem:[%s1473 + $0x38] sm:$0xff]
        %v1482 = vld [vmem:[%s1473 + $0x40] sm:$0xff]
        %v1483 = vld [vmem:[%s1473 + $0x48] sm:$0xff]
        %v1484 = vld [vmem:[%s1473 + $0x50] sm:$0xff]
        %v1485 = vld [vmem:[%s1473 + $0x58] sm:$0xff]
        %v1486 = vld [vmem:[%s1473 + $0x60] sm:$0xff]
        %v1487 = vld [vmem:[%s1473 + $0x68] sm:$0xff]
        %v1488 = vld [vmem:[%s1473 + $0x70] sm:$0xff]
        %v1489 = vld [vmem:[%s1473 + $0x78] sm:$0xff]
        %s1490 = scalar_lea.vmem %s5, 4
        %v1491 = vld [vmem:[%s1490] sm:$0x1]
        %v1492 = vld [vmem:[%s1490 + $0x1] sm:$0x1]
        %v1493 = vld [vmem:[%s1490 + $0x2] sm:$0x1]
        %v1494 = vld [vmem:[%s1490 + $0x3] sm:$0x1]
        %v1499 = vperm.slane %v1491, 0
        %v1500 = vperm.slane %v1492, 0
        %v1501 = vperm.slane %v1493, 0
        %v1502 = vperm.slane %v1494, 0
        %v1508 = vsel %vm590, %v1472, 0
        %1510 = vmatpush.msra.mxu0 0.0
        %1511 = vmatpush.msra.mxu0 0.0
        %1512 = vmatpush.msra.mxu0 0.0
        %1513 = vmatpush.msra.mxu0 0.0
        %1514 = vmatpush.msra.mxu0 0.0
        %1515 = vmatpush.msra.mxu0 0.0
        %1516 = vmatpush.msra.mxu0 0.0
        %1517 = vmatpush.msra.mxu0 0.0
        %1518 = vmatpush.msra.mxu0 0.0
        %1519 = vmatpush.msra.mxu0 0.0
        %1520 = vmatpush.msra.mxu0 0.0
        %1521 = vmatpush.msra.mxu0 0.0
        %1522 = vmatpush.msra.mxu0 %v1477
        %1523 = vmatpush.msra.mxu0 %v1476
        %1524 = vmatpush.msra.mxu0 %v1475
        %1525 = vmatpush.msra.mxu0 %v1474
        %1526 = vmatmul.f32.gmra.mxu0 %v1508
        %v1527 = vpop.f32.mrf.mxu0
        %v1528 = vadd.f32 %v1499, %v1527
        %1529 = vdwg.mxu0
        %1530 = vmatpush.msra.mxu0 0.0
        %1531 = vmatpush.msra.mxu0 0.0
        %1532 = vmatpush.msra.mxu0 0.0
        %1533 = vmatpush.msra.mxu0 0.0
        %1534 = vmatpush.msra.mxu0 0.0
        %1535 = vmatpush.msra.mxu0 0.0
        %1536 = vmatpush.msra.mxu0 0.0
        %1537 = vmatpush.msra.mxu0 0.0
        %1538 = vmatpush.msra.mxu0 0.0
        %1539 = vmatpush.msra.mxu0 0.0
        %1540 = vmatpush.msra.mxu0 0.0
        %1541 = vmatpush.msra.mxu0 0.0
        %1542 = vmatpush.msra.mxu0 %v1481
        %1543 = vmatpush.msra.mxu0 %v1480
        %1544 = vmatpush.msra.mxu0 %v1479
        %1545 = vmatpush.msra.mxu0 %v1478
        %1546 = vmatmul.f32.gmra.mxu0 %v1508
        %v1547 = vpop.f32.mrf.mxu0
        %v1548 = vadd.f32 %v1500, %v1547
        %1549 = vdwg.mxu0
        %1550 = vmatpush.msra.mxu0 0.0
        %1551 = vmatpush.msra.mxu0 0.0
        %1552 = vmatpush.msra.mxu0 0.0
        %1553 = vmatpush.msra.mxu0 0.0
        %1554 = vmatpush.msra.mxu0 0.0
        %1555 = vmatpush.msra.mxu0 0.0
        %1556 = vmatpush.msra.mxu0 0.0
        %1557 = vmatpush.msra.mxu0 0.0
        %1558 = vmatpush.msra.mxu0 0.0
        %1559 = vmatpush.msra.mxu0 0.0
        %1560 = vmatpush.msra.mxu0 0.0
        %1561 = vmatpush.msra.mxu0 0.0
        %1562 = vmatpush.msra.mxu0 %v1485
        %1563 = vmatpush.msra.mxu0 %v1484
        %1564 = vmatpush.msra.mxu0 %v1483
        %1565 = vmatpush.msra.mxu0 %v1482
        %1566 = vmatmul.f32.gmra.mxu0 %v1508
        %v1567 = vpop.f32.mrf.mxu0
        %v1568 = vadd.f32 %v1501, %v1567
        %1569 = vdwg.mxu0
        %1570 = vmatpush.msra.mxu0 0.0
        %1571 = vmatpush.msra.mxu0 0.0
        %1572 = vmatpush.msra.mxu0 0.0
        %1573 = vmatpush.msra.mxu0 0.0
        %1574 = vmatpush.msra.mxu0 0.0
        %1575 = vmatpush.msra.mxu0 0.0
        %1576 = vmatpush.msra.mxu0 0.0
        %1577 = vmatpush.msra.mxu0 0.0
        %1578 = vmatpush.msra.mxu0 0.0
        %1579 = vmatpush.msra.mxu0 0.0
        %1580 = vmatpush.msra.mxu0 0.0
        %1581 = vmatpush.msra.mxu0 0.0
        %1582 = vmatpush.msra.mxu0 %v1489
        %1583 = vmatpush.msra.mxu0 %v1488
        %1584 = vmatpush.msra.mxu0 %v1487
        %1585 = vmatpush.msra.mxu0 %v1486
        %1586 = vmatmul.f32.gmra.mxu0 %v1508
        %v1587 = vpop.f32.mrf.mxu0
        %v1588 = vadd.f32 %v1502, %v1587
        %1589 = vdwg.mxu0
        %s1590 = scalar_lea.vmem %s6, 128
        %v1591 = vld [vmem:[%s1590] sm:$0xff]
        %v1592 = vld [vmem:[%s1590 + $0x8] sm:$0xff]
        %v1593 = vld [vmem:[%s1590 + $0x10] sm:$0xff]
        %v1594 = vld [vmem:[%s1590 + $0x18] sm:$0xff]
        %v1595 = vld [vmem:[%s1590 + $0x20] sm:$0xff]
        %v1596 = vld [vmem:[%s1590 + $0x28] sm:$0xff]
        %v1597 = vld [vmem:[%s1590 + $0x30] sm:$0xff]
        %v1598 = vld [vmem:[%s1590 + $0x38] sm:$0xff]
        %v1599 = vld [vmem:[%s1590 + $0x40] sm:$0xff]
        %v1600 = vld [vmem:[%s1590 + $0x48] sm:$0xff]
        %v1601 = vld [vmem:[%s1590 + $0x50] sm:$0xff]
        %v1602 = vld [vmem:[%s1590 + $0x58] sm:$0xff]
        %v1603 = vld [vmem:[%s1590 + $0x60] sm:$0xff]
        %v1604 = vld [vmem:[%s1590 + $0x68] sm:$0xff]
        %v1605 = vld [vmem:[%s1590 + $0x70] sm:$0xff]
        %v1606 = vld [vmem:[%s1590 + $0x78] sm:$0xff]
        %s1607 = scalar_lea.vmem %s7, 4
        %v1608 = vld [vmem:[%s1607] sm:$0x1]
        %v1609 = vld [vmem:[%s1607 + $0x1] sm:$0x1]
        %v1610 = vld [vmem:[%s1607 + $0x2] sm:$0x1]
        %v1611 = vld [vmem:[%s1607 + $0x3] sm:$0x1]
        %v1616 = vperm.slane %v1608, 0
        %v1617 = vperm.slane %v1609, 0
        %v1618 = vperm.slane %v1610, 0
        %v1619 = vperm.slane %v1611, 0
        %1624 = vmatpush.msra.mxu0 0.0
        %1625 = vmatpush.msra.mxu0 0.0
        %1626 = vmatpush.msra.mxu0 0.0
        %1627 = vmatpush.msra.mxu0 0.0
        %1628 = vmatpush.msra.mxu0 0.0
        %1629 = vmatpush.msra.mxu0 0.0
        %1630 = vmatpush.msra.mxu0 0.0
        %1631 = vmatpush.msra.mxu0 0.0
        %1632 = vmatpush.msra.mxu0 0.0
        %1633 = vmatpush.msra.mxu0 0.0
        %1634 = vmatpush.msra.mxu0 0.0
        %1635 = vmatpush.msra.mxu0 0.0
        %1636 = vmatpush.msra.mxu0 %v1594
        %1637 = vmatpush.msra.mxu0 %v1593
        %1638 = vmatpush.msra.mxu0 %v1592
        %1639 = vmatpush.msra.mxu0 %v1591
        %1640 = vmatmul.f32.gmra.mxu0 %v1508
        %v1641 = vpop.f32.mrf.mxu0
        %v1642 = vadd.f32 %v1616, %v1641
        %1643 = vdwg.mxu0
        %1644 = vmatpush.msra.mxu0 0.0
        %1645 = vmatpush.msra.mxu0 0.0
        %1646 = vmatpush.msra.mxu0 0.0
        %1647 = vmatpush.msra.mxu0 0.0
        %1648 = vmatpush.msra.mxu0 0.0
        %1649 = vmatpush.msra.mxu0 0.0
        %1650 = vmatpush.msra.mxu0 0.0
        %1651 = vmatpush.msra.mxu0 0.0
        %1652 = vmatpush.msra.mxu0 0.0
        %1653 = vmatpush.msra.mxu0 0.0
        %1654 = vmatpush.msra.mxu0 0.0
        %1655 = vmatpush.msra.mxu0 0.0
        %1656 = vmatpush.msra.mxu0 %v1598
        %1657 = vmatpush.msra.mxu0 %v1597
        %1658 = vmatpush.msra.mxu0 %v1596
        %1659 = vmatpush.msra.mxu0 %v1595
        %1660 = vmatmul.f32.gmra.mxu0 %v1508
        %v1661 = vpop.f32.mrf.mxu0
        %v1662 = vadd.f32 %v1617, %v1661
        %1663 = vdwg.mxu0
        %1664 = vmatpush.msra.mxu0 0.0
        %1665 = vmatpush.msra.mxu0 0.0
        %1666 = vmatpush.msra.mxu0 0.0
        %1667 = vmatpush.msra.mxu0 0.0
        %1668 = vmatpush.msra.mxu0 0.0
        %1669 = vmatpush.msra.mxu0 0.0
        %1670 = vmatpush.msra.mxu0 0.0
        %1671 = vmatpush.msra.mxu0 0.0
        %1672 = vmatpush.msra.mxu0 0.0
        %1673 = vmatpush.msra.mxu0 0.0
        %1674 = vmatpush.msra.mxu0 0.0
        %1675 = vmatpush.msra.mxu0 0.0
        %1676 = vmatpush.msra.mxu0 %v1602
        %1677 = vmatpush.msra.mxu0 %v1601
        %1678 = vmatpush.msra.mxu0 %v1600
        %1679 = vmatpush.msra.mxu0 %v1599
        %1680 = vmatmul.f32.gmra.mxu0 %v1508
        %v1681 = vpop.f32.mrf.mxu0
        %v1682 = vadd.f32 %v1618, %v1681
        %1683 = vdwg.mxu0
        %1684 = vmatpush.msra.mxu0 0.0
        %1685 = vmatpush.msra.mxu0 0.0
        %1686 = vmatpush.msra.mxu0 0.0
        %1687 = vmatpush.msra.mxu0 0.0
        %1688 = vmatpush.msra.mxu0 0.0
        %1689 = vmatpush.msra.mxu0 0.0
        %1690 = vmatpush.msra.mxu0 0.0
        %1691 = vmatpush.msra.mxu0 0.0
        %1692 = vmatpush.msra.mxu0 0.0
        %1693 = vmatpush.msra.mxu0 0.0
        %1694 = vmatpush.msra.mxu0 0.0
        %1695 = vmatpush.msra.mxu0 0.0
        %1696 = vmatpush.msra.mxu0 %v1606
        %1697 = vmatpush.msra.mxu0 %v1605
        %1698 = vmatpush.msra.mxu0 %v1604
        %1699 = vmatpush.msra.mxu0 %v1603
        %1700 = vmatmul.f32.gmra.mxu0 %v1508
        %v1701 = vpop.f32.mrf.mxu0
        %v1702 = vadd.f32 %v1619, %v1701
        %1703 = vdwg.mxu0
        %s1704 = scalar_lea.vmem %s8, 128
        %v1705 = vld [vmem:[%s1704] sm:$0xff]
        %v1706 = vld [vmem:[%s1704 + $0x8] sm:$0xff]
        %v1707 = vld [vmem:[%s1704 + $0x10] sm:$0xff]
        %v1708 = vld [vmem:[%s1704 + $0x18] sm:$0xff]
        %v1709 = vld [vmem:[%s1704 + $0x20] sm:$0xff]
        %v1710 = vld [vmem:[%s1704 + $0x28] sm:$0xff]
        %v1711 = vld [vmem:[%s1704 + $0x30] sm:$0xff]
        %v1712 = vld [vmem:[%s1704 + $0x38] sm:$0xff]
        %v1713 = vld [vmem:[%s1704 + $0x40] sm:$0xff]
        %v1714 = vld [vmem:[%s1704 + $0x48] sm:$0xff]
        %v1715 = vld [vmem:[%s1704 + $0x50] sm:$0xff]
        %v1716 = vld [vmem:[%s1704 + $0x58] sm:$0xff]
        %v1717 = vld [vmem:[%s1704 + $0x60] sm:$0xff]
        %v1718 = vld [vmem:[%s1704 + $0x68] sm:$0xff]
        %v1719 = vld [vmem:[%s1704 + $0x70] sm:$0xff]
        %v1720 = vld [vmem:[%s1704 + $0x78] sm:$0xff]
        %s1721 = scalar_lea.vmem %s9, 4
        %v1722 = vld [vmem:[%s1721] sm:$0x1]
        %v1723 = vld [vmem:[%s1721 + $0x1] sm:$0x1]
        %v1724 = vld [vmem:[%s1721 + $0x2] sm:$0x1]
        %v1725 = vld [vmem:[%s1721 + $0x3] sm:$0x1]
        %v1730 = vperm.slane %v1722, 0
        %v1731 = vperm.slane %v1723, 0
        %v1732 = vperm.slane %v1724, 0
        %v1733 = vperm.slane %v1725, 0
        %1738 = vmatpush.msra.mxu0 0.0
        %1739 = vmatpush.msra.mxu0 0.0
        %1740 = vmatpush.msra.mxu0 0.0
        %1741 = vmatpush.msra.mxu0 0.0
        %1742 = vmatpush.msra.mxu0 0.0
        %1743 = vmatpush.msra.mxu0 0.0
        %1744 = vmatpush.msra.mxu0 0.0
        %1745 = vmatpush.msra.mxu0 0.0
        %1746 = vmatpush.msra.mxu0 0.0
        %1747 = vmatpush.msra.mxu0 0.0
        %1748 = vmatpush.msra.mxu0 0.0
        %1749 = vmatpush.msra.mxu0 0.0
        %1750 = vmatpush.msra.mxu0 %v1708
        %1751 = vmatpush.msra.mxu0 %v1707
        %1752 = vmatpush.msra.mxu0 %v1706
        %1753 = vmatpush.msra.mxu0 %v1705
        %1754 = vmatmul.f32.gmra.mxu0 %v1508
        %v1755 = vpop.f32.mrf.mxu0
        %v1756 = vadd.f32 %v1730, %v1755
        %1757 = vdwg.mxu0
        %1758 = vmatpush.msra.mxu0 0.0
        %1759 = vmatpush.msra.mxu0 0.0
        %1760 = vmatpush.msra.mxu0 0.0
        %1761 = vmatpush.msra.mxu0 0.0
        %1762 = vmatpush.msra.mxu0 0.0
        %1763 = vmatpush.msra.mxu0 0.0
        %1764 = vmatpush.msra.mxu0 0.0
        %1765 = vmatpush.msra.mxu0 0.0
        %1766 = vmatpush.msra.mxu0 0.0
        %1767 = vmatpush.msra.mxu0 0.0
        %1768 = vmatpush.msra.mxu0 0.0
        %1769 = vmatpush.msra.mxu0 0.0
        %1770 = vmatpush.msra.mxu0 %v1712
        %1771 = vmatpush.msra.mxu0 %v1711
        %1772 = vmatpush.msra.mxu0 %v1710
        %1773 = vmatpush.msra.mxu0 %v1709
        %1774 = vmatmul.f32.gmra.mxu0 %v1508
        %v1775 = vpop.f32.mrf.mxu0
        %v1776 = vadd.f32 %v1731, %v1775
        %1777 = vdwg.mxu0
        %1778 = vmatpush.msra.mxu0 0.0
        %1779 = vmatpush.msra.mxu0 0.0
        %1780 = vmatpush.msra.mxu0 0.0
        %1781 = vmatpush.msra.mxu0 0.0
        %1782 = vmatpush.msra.mxu0 0.0
        %1783 = vmatpush.msra.mxu0 0.0
        %1784 = vmatpush.msra.mxu0 0.0
        %1785 = vmatpush.msra.mxu0 0.0
        %1786 = vmatpush.msra.mxu0 0.0
        %1787 = vmatpush.msra.mxu0 0.0
        %1788 = vmatpush.msra.mxu0 0.0
        %1789 = vmatpush.msra.mxu0 0.0
        %1790 = vmatpush.msra.mxu0 %v1716
        %1791 = vmatpush.msra.mxu0 %v1715
        %1792 = vmatpush.msra.mxu0 %v1714
        %1793 = vmatpush.msra.mxu0 %v1713
        %1794 = vmatmul.f32.gmra.mxu0 %v1508
        %v1795 = vpop.f32.mrf.mxu0
        %v1796 = vadd.f32 %v1732, %v1795
        %1797 = vdwg.mxu0
        %1798 = vmatpush.msra.mxu0 0.0
        %1799 = vmatpush.msra.mxu0 0.0
        %1800 = vmatpush.msra.mxu0 0.0
        %1801 = vmatpush.msra.mxu0 0.0
        %1802 = vmatpush.msra.mxu0 0.0
        %1803 = vmatpush.msra.mxu0 0.0
        %1804 = vmatpush.msra.mxu0 0.0
        %1805 = vmatpush.msra.mxu0 0.0
        %1806 = vmatpush.msra.mxu0 0.0
        %1807 = vmatpush.msra.mxu0 0.0
        %1808 = vmatpush.msra.mxu0 0.0
        %1809 = vmatpush.msra.mxu0 0.0
        %1810 = vmatpush.msra.mxu0 %v1720
        %1811 = vmatpush.msra.mxu0 %v1719
        %1812 = vmatpush.msra.mxu0 %v1718
        %1813 = vmatpush.msra.mxu0 %v1717
        %1814 = vmatmul.f32.gmra.mxu0 %v1508
        %v1815 = vpop.f32.mrf.mxu0
        %v1816 = vadd.f32 %v1733, %v1815
        %1817 = vdwg.mxu0
        %v1819 = vsel %vm970, %v1528, 0
        %v1822 = vsel %vm970, %v1642, 0
        %1824 = vmatpush.xpose.msra.mxu0 0.0
        %1825 = vmatpush.xpose.msra.mxu0 0.0
        %1826 = vmatpush.xpose.msra.mxu0 0.0
        %1827 = vmatpush.xpose.msra.mxu0 0.0
        %1828 = vmatpush.xpose.msra.mxu0 0.0
        %1829 = vmatpush.xpose.msra.mxu0 0.0
        %1830 = vmatpush.xpose.msra.mxu0 0.0
        %1831 = vmatpush.xpose.msra.mxu0 0.0
        %1832 = vmatpush.xpose.msra.mxu0 0.0
        %1833 = vmatpush.xpose.msra.mxu0 0.0
        %1834 = vmatpush.xpose.msra.mxu0 0.0
        %1835 = vmatpush.xpose.msra.mxu0 0.0
        %1836 = vmatpush.xpose.msra.mxu0 0.0
        %1837 = vmatpush.xpose.msra.mxu0 0.0
        %1838 = vmatpush.xpose.msra.mxu0 0.0
        %1839 = vmatpush.xpose.msra.mxu0 %v1822
        %1840 = vmatmul.f32.gmra.mxu0 %v1819
        %v1841 = vpop.f32.mrf.mxu0
        %v1842 = vadd.f32 0.0, %v1841
        %1843 = vdwg.mxu0
        %v1845 = vsel %vm970, %v1548, 0
        %v1848 = vsel %vm970, %v1662, 0
        %1850 = vmatpush.xpose.msra.mxu0 0.0
        %1851 = vmatpush.xpose.msra.mxu0 0.0
        %1852 = vmatpush.xpose.msra.mxu0 0.0
        %1853 = vmatpush.xpose.msra.mxu0 0.0
        %1854 = vmatpush.xpose.msra.mxu0 0.0
        %1855 = vmatpush.xpose.msra.mxu0 0.0
        %1856 = vmatpush.xpose.msra.mxu0 0.0
        %1857 = vmatpush.xpose.msra.mxu0 0.0
        %1858 = vmatpush.xpose.msra.mxu0 0.0
        %1859 = vmatpush.xpose.msra.mxu0 0.0
        %1860 = vmatpush.xpose.msra.mxu0 0.0
        %1861 = vmatpush.xpose.msra.mxu0 0.0
        %1862 = vmatpush.xpose.msra.mxu0 0.0
        %1863 = vmatpush.xpose.msra.mxu0 0.0
        %1864 = vmatpush.xpose.msra.mxu0 0.0
        %1865 = vmatpush.xpose.msra.mxu0 %v1848
        %1866 = vmatmul.f32.gmra.mxu0 %v1845
        %v1867 = vpop.f32.mrf.mxu0
        %v1868 = vadd.f32 0.0, %v1867
        %1869 = vdwg.mxu0
        %v1871 = vsel %vm970, %v1568, 0
        %v1874 = vsel %vm970, %v1682, 0
        %1876 = vmatpush.xpose.msra.mxu0 0.0
        %1877 = vmatpush.xpose.msra.mxu0 0.0
        %1878 = vmatpush.xpose.msra.mxu0 0.0
        %1879 = vmatpush.xpose.msra.mxu0 0.0
        %1880 = vmatpush.xpose.msra.mxu0 0.0
        %1881 = vmatpush.xpose.msra.mxu0 0.0
        %1882 = vmatpush.xpose.msra.mxu0 0.0
        %1883 = vmatpush.xpose.msra.mxu0 0.0
        %1884 = vmatpush.xpose.msra.mxu0 0.0
        %1885 = vmatpush.xpose.msra.mxu0 0.0
        %1886 = vmatpush.xpose.msra.mxu0 0.0
        %1887 = vmatpush.xpose.msra.mxu0 0.0
        %1888 = vmatpush.xpose.msra.mxu0 0.0
        %1889 = vmatpush.xpose.msra.mxu0 0.0
        %1890 = vmatpush.xpose.msra.mxu0 0.0
        %1891 = vmatpush.xpose.msra.mxu0 %v1874
        %1892 = vmatmul.f32.gmra.mxu0 %v1871
        %v1893 = vpop.f32.mrf.mxu0
        %v1894 = vadd.f32 0.0, %v1893
        %1895 = vdwg.mxu0
        %v1897 = vsel %vm970, %v1588, 0
        %v1900 = vsel %vm970, %v1702, 0
        %1902 = vmatpush.xpose.msra.mxu0 0.0
        %1903 = vmatpush.xpose.msra.mxu0 0.0
        %1904 = vmatpush.xpose.msra.mxu0 0.0
        %1905 = vmatpush.xpose.msra.mxu0 0.0
        %1906 = vmatpush.xpose.msra.mxu0 0.0
        %1907 = vmatpush.xpose.msra.mxu0 0.0
        %1908 = vmatpush.xpose.msra.mxu0 0.0
        %1909 = vmatpush.xpose.msra.mxu0 0.0
        %1910 = vmatpush.xpose.msra.mxu0 0.0
        %1911 = vmatpush.xpose.msra.mxu0 0.0
        %1912 = vmatpush.xpose.msra.mxu0 0.0
        %1913 = vmatpush.xpose.msra.mxu0 0.0
        %1914 = vmatpush.xpose.msra.mxu0 0.0
        %1915 = vmatpush.xpose.msra.mxu0 0.0
        %1916 = vmatpush.xpose.msra.mxu0 0.0
        %1917 = vmatpush.xpose.msra.mxu0 %v1900
        %1918 = vmatmul.f32.gmra.mxu0 %v1897
        %v1919 = vpop.f32.mrf.mxu0
        %v1920 = vadd.f32 0.0, %v1919
        %1921 = vdwg.mxu0
        %v1922 = vmul.f32 %v1842, 0.35355338
        %v1923 = vmul.f32 %v1868, 0.35355338
        %v1924 = vmul.f32 %v1894, 0.35355338
        %v1925 = vmul.f32 %v1920, 0.35355338
        %v1926 = vsel %vm1081, -1e+09, %v1922
        %v1927 = vsel %vm1081, -1e+09, %v1923
        %v1928 = vsel %vm1081, -1e+09, %v1924
        %v1929 = vsel %vm1081, -1e+09, %v1925
        %v1930 = vsel %vm970, %v1926, -inf
        %1931 = vmax.xlane.f32.xlu0 %v1930
        %v1932 = vpop.xlane.xlu0 %1931
        %v1933 = vsel %vm970, %v1927, -inf
        %1934 = vmax.xlane.f32.xlu0 %v1933
        %v1935 = vpop.xlane.xlu0 %1934
        %v1936 = vsel %vm970, %v1928, -inf
        %1937 = vmax.xlane.f32.xlu0 %v1936
        %v1938 = vpop.xlane.xlu0 %1937
        %v1939 = vsel %vm970, %v1929, -inf
        %1940 = vmax.xlane.f32.xlu0 %v1939
        %v1941 = vpop.xlane.xlu0 %1940
        %v1942 = vsub.f32 %v1926, %v1932
        %v1943 = vsub.f32 %v1927, %v1935
        %v1944 = vsub.f32 %v1928, %v1938
        %v1945 = vsub.f32 %v1929, %v1941
        %v1946 = vmul.f32 %v1942, 1.442695
        %v1947 = vpow.pop %v1946
        %v1948 = vmul.f32 %v1943, 1.442695
        %v1949 = vpow.pop %v1948
        %v1950 = vmul.f32 %v1944, 1.442695
        %v1951 = vpow.pop %v1950
        %v1952 = vmul.f32 %v1945, 1.442695
        %v1953 = vpow.pop %v1952
        %v1954 = vsel %vm970, %v1947, 0.0
        %1955 = vadd.xlane.f32.xlu0 %v1954
        %v1956 = vpop.xlane.xlu0 %1955
        %v1957 = vsel %vm970, %v1949, 0.0
        %1958 = vadd.xlane.f32.xlu0 %v1957
        %v1959 = vpop.xlane.xlu0 %1958
        %v1960 = vsel %vm970, %v1951, 0.0
        %1961 = vadd.xlane.f32.xlu0 %v1960
        %v1962 = vpop.xlane.xlu0 %1961
        %v1963 = vsel %vm970, %v1953, 0.0
        %1964 = vadd.xlane.f32.xlu0 %v1963
        %v1965 = vpop.xlane.xlu0 %1964
        %v1966 = vrcp.pop %v1956
        %v1967 = vrcp.pop %v1959
        %v1968 = vrcp.pop %v1962
        %v1969 = vrcp.pop %v1965
        %v1970 = vmul.f32 %v1947, %v1966
        %v1971 = vmul.f32 %v1949, %v1967
        %v1972 = vmul.f32 %v1951, %v1968
        %v1973 = vmul.f32 %v1953, %v1969
        %v1975 = vsel %vm970, %v1970, 0
        %1977 = vmatpush.msra.mxu0 0.0
        %1978 = vmatpush.msra.mxu0 0.0
        %1979 = vmatpush.msra.mxu0 0.0
        %1980 = vmatpush.msra.mxu0 0.0
        %1981 = vmatpush.msra.mxu0 0.0
        %1982 = vmatpush.msra.mxu0 0.0
        %1983 = vmatpush.msra.mxu0 0.0
        %1984 = vmatpush.msra.mxu0 0.0
        %1985 = vmatpush.msra.mxu0 0.0
        %1986 = vmatpush.msra.mxu0 0.0
        %1987 = vmatpush.msra.mxu0 0.0
        %1988 = vmatpush.msra.mxu0 0.0
        %1989 = vmatpush.msra.mxu0 0.0
        %1990 = vmatpush.msra.mxu0 0.0
        %1991 = vmatpush.msra.mxu0 0.0
        %1992 = vmatpush.msra.mxu0 %v1756
        %1993 = vmatmul.f32.gmra.mxu0 %v1975
        %v1994 = vpop.f32.mrf.mxu0
        %v1995 = vadd.f32 0.0, %v1994
        %1996 = vdwg.mxu0
        %v1998 = vsel %vm970, %v1971, 0
        %2000 = vmatpush.msra.mxu0 0.0
        %2001 = vmatpush.msra.mxu0 0.0
        %2002 = vmatpush.msra.mxu0 0.0
        %2003 = vmatpush.msra.mxu0 0.0
        %2004 = vmatpush.msra.mxu0 0.0
        %2005 = vmatpush.msra.mxu0 0.0
        %2006 = vmatpush.msra.mxu0 0.0
        %2007 = vmatpush.msra.mxu0 0.0
        %2008 = vmatpush.msra.mxu0 0.0
        %2009 = vmatpush.msra.mxu0 0.0
        %2010 = vmatpush.msra.mxu0 0.0
        %2011 = vmatpush.msra.mxu0 0.0
        %2012 = vmatpush.msra.mxu0 0.0
        %2013 = vmatpush.msra.mxu0 0.0
        %2014 = vmatpush.msra.mxu0 0.0
        %2015 = vmatpush.msra.mxu0 %v1776
        %2016 = vmatmul.f32.gmra.mxu0 %v1998
        %v2017 = vpop.f32.mrf.mxu0
        %v2018 = vadd.f32 0.0, %v2017
        %2019 = vdwg.mxu0
        %v2021 = vsel %vm970, %v1972, 0
        %2023 = vmatpush.msra.mxu0 0.0
        %2024 = vmatpush.msra.mxu0 0.0
        %2025 = vmatpush.msra.mxu0 0.0
        %2026 = vmatpush.msra.mxu0 0.0
        %2027 = vmatpush.msra.mxu0 0.0
        %2028 = vmatpush.msra.mxu0 0.0
        %2029 = vmatpush.msra.mxu0 0.0
        %2030 = vmatpush.msra.mxu0 0.0
        %2031 = vmatpush.msra.mxu0 0.0
        %2032 = vmatpush.msra.mxu0 0.0
        %2033 = vmatpush.msra.mxu0 0.0
        %2034 = vmatpush.msra.mxu0 0.0
        %2035 = vmatpush.msra.mxu0 0.0
        %2036 = vmatpush.msra.mxu0 0.0
        %2037 = vmatpush.msra.mxu0 0.0
        %2038 = vmatpush.msra.mxu0 %v1796
        %2039 = vmatmul.f32.gmra.mxu0 %v2021
        %v2040 = vpop.f32.mrf.mxu0
        %v2041 = vadd.f32 0.0, %v2040
        %2042 = vdwg.mxu0
        %v2044 = vsel %vm970, %v1973, 0
        %2046 = vmatpush.msra.mxu0 0.0
        %2047 = vmatpush.msra.mxu0 0.0
        %2048 = vmatpush.msra.mxu0 0.0
        %2049 = vmatpush.msra.mxu0 0.0
        %2050 = vmatpush.msra.mxu0 0.0
        %2051 = vmatpush.msra.mxu0 0.0
        %2052 = vmatpush.msra.mxu0 0.0
        %2053 = vmatpush.msra.mxu0 0.0
        %2054 = vmatpush.msra.mxu0 0.0
        %2055 = vmatpush.msra.mxu0 0.0
        %2056 = vmatpush.msra.mxu0 0.0
        %2057 = vmatpush.msra.mxu0 0.0
        %2058 = vmatpush.msra.mxu0 0.0
        %2059 = vmatpush.msra.mxu0 0.0
        %2060 = vmatpush.msra.mxu0 0.0
        %2061 = vmatpush.msra.mxu0 %v1816
        %2062 = vmatmul.f32.gmra.mxu0 %v2044
        %v2063 = vpop.f32.mrf.mxu0
        %v2064 = vadd.f32 0.0, %v2063
        %2065 = vdwg.mxu0
        %s2066 = scalar_lea.vmem %s10, 32
        %v2067 = vld [vmem:[%s2066] sm:$0xff]
        %v2068 = vld [vmem:[%s2066 + $0x8] sm:$0xff]
        %v2069 = vld [vmem:[%s2066 + $0x10] sm:$0xff]
        %v2070 = vld [vmem:[%s2066 + $0x18] sm:$0xff]
        %v2072 = vsel %vm970, %v1995, 0
        %2074 = vmatpush.msra.mxu0 0.0
        %2075 = vmatpush.msra.mxu0 0.0
        %2076 = vmatpush.msra.mxu0 0.0
        %2077 = vmatpush.msra.mxu0 0.0
        %2078 = vmatpush.msra.mxu0 0.0
        %2079 = vmatpush.msra.mxu0 0.0
        %2080 = vmatpush.msra.mxu0 0.0
        %2081 = vmatpush.msra.mxu0 0.0
        %2082 = vmatpush.msra.mxu0 0.0
        %2083 = vmatpush.msra.mxu0 0.0
        %2084 = vmatpush.msra.mxu0 0.0
        %2085 = vmatpush.msra.mxu0 0.0
        %2086 = vmatpush.msra.mxu0 0.0
        %2087 = vmatpush.msra.mxu0 0.0
        %2088 = vmatpush.msra.mxu0 0.0
        %2089 = vmatpush.msra.mxu0 %v2067
        %2090 = vmatmul.f32.gmra.mxu0 %v2072
        %v2091 = vpop.f32.mrf.mxu0
        %v2092 = vadd.f32 0.0, %v2091
        %2093 = vdwg.mxu0
        %v2095 = vsel %vm970, %v2018, 0
        %2097 = vmatpush.msra.mxu0 0.0
        %2098 = vmatpush.msra.mxu0 0.0
        %2099 = vmatpush.msra.mxu0 0.0
        %2100 = vmatpush.msra.mxu0 0.0
        %2101 = vmatpush.msra.mxu0 0.0
        %2102 = vmatpush.msra.mxu0 0.0
        %2103 = vmatpush.msra.mxu0 0.0
        %2104 = vmatpush.msra.mxu0 0.0
        %2105 = vmatpush.msra.mxu0 0.0
        %2106 = vmatpush.msra.mxu0 0.0
        %2107 = vmatpush.msra.mxu0 0.0
        %2108 = vmatpush.msra.mxu0 0.0
        %2109 = vmatpush.msra.mxu0 0.0
        %2110 = vmatpush.msra.mxu0 0.0
        %2111 = vmatpush.msra.mxu0 0.0
        %2112 = vmatpush.msra.mxu0 %v2068
        %2113 = vmatmul.f32.gmra.mxu0 %v2095
        %v2114 = vpop.f32.mrf.mxu0
        %v2115 = vadd.f32 0.0, %v2114
        %2116 = vdwg.mxu0
        %v2118 = vsel %vm970, %v2041, 0
        %2120 = vmatpush.msra.mxu0 0.0
        %2121 = vmatpush.msra.mxu0 0.0
        %2122 = vmatpush.msra.mxu0 0.0
        %2123 = vmatpush.msra.mxu0 0.0
        %2124 = vmatpush.msra.mxu0 0.0
        %2125 = vmatpush.msra.mxu0 0.0
        %2126 = vmatpush.msra.mxu0 0.0
        %2127 = vmatpush.msra.mxu0 0.0
        %2128 = vmatpush.msra.mxu0 0.0
        %2129 = vmatpush.msra.mxu0 0.0
        %2130 = vmatpush.msra.mxu0 0.0
        %2131 = vmatpush.msra.mxu0 0.0
        %2132 = vmatpush.msra.mxu0 0.0
        %2133 = vmatpush.msra.mxu0 0.0
        %2134 = vmatpush.msra.mxu0 0.0
        %2135 = vmatpush.msra.mxu0 %v2069
        %2136 = vmatmul.f32.gmra.mxu0 %v2118
        %v2137 = vpop.f32.mrf.mxu0
        %v2138 = vadd.f32 0.0, %v2137
        %2139 = vdwg.mxu0
        %v2141 = vsel %vm970, %v2064, 0
        %2143 = vmatpush.msra.mxu0 0.0
        %2144 = vmatpush.msra.mxu0 0.0
        %2145 = vmatpush.msra.mxu0 0.0
        %2146 = vmatpush.msra.mxu0 0.0
        %2147 = vmatpush.msra.mxu0 0.0
        %2148 = vmatpush.msra.mxu0 0.0
        %2149 = vmatpush.msra.mxu0 0.0
        %2150 = vmatpush.msra.mxu0 0.0
        %2151 = vmatpush.msra.mxu0 0.0
        %2152 = vmatpush.msra.mxu0 0.0
        %2153 = vmatpush.msra.mxu0 0.0
        %2154 = vmatpush.msra.mxu0 0.0
        %2155 = vmatpush.msra.mxu0 0.0
        %2156 = vmatpush.msra.mxu0 0.0
        %2157 = vmatpush.msra.mxu0 0.0
        %2158 = vmatpush.msra.mxu0 %v2070
        %2159 = vmatmul.f32.gmra.mxu0 %v2141
        %v2160 = vpop.f32.mrf.mxu0
        %v2161 = vadd.f32 0.0, %v2160
        %2162 = vdwg.mxu0
        %v2163 = vsel %vm590, %v2092, 0.0
        %v2164 = vsel %vm590, %v2115, 0.0
        %v2165 = vadd.f32 %v2163, %v2164
        %v2166 = vsel %vm590, %v2138, 0.0
        %v2167 = vadd.f32 %v2165, %v2166
        %v2168 = vsel %vm590, %v2161, 0.0
        %v2169 = vadd.f32 %v2167, %v2168
        %v2170 = vadd.f32 %v1435, %v2169
        %s2171 = scalar_lea.vmem %s11, 1
        %v2172 = vld [vmem:[%s2171] sm:$0x1]
        %v2174 = vperm.slane %v2172, 0
        %v2176 = vadd.f32 %v2170, %v2174
        %s2177 = scalar_lea.vmem %s12, 1
        %v2178 = vld [vmem:[%s2177] sm:$0x1]
        %s2179 = scalar_lea.vmem %s13, 1
        %v2180 = vld [vmem:[%s2179] sm:$0x1]
        %v2181 = vsel %vm590, %v2176, 0.0
        %2182 = vadd.xlane.f32.xlu0 %v2181
        %v2183 = vpop.xlane.xlu0 %2182
        %v2184 = vmul.f32 %v2183, %v600
        %v2185 = vsub.f32 %v2176, %v2184
        %v2186 = vmul.f32 %v2185, %v2185
        %v2187 = vsel %vm590, %v2186, 0.0
        %2188 = vadd.xlane.f32.xlu0 %v2187
        %v2189 = vpop.xlane.xlu0 %2188
        %v2190 = vmul.f32 %v2189, 0.032258064
        %v2191 = vrsqrt.pop %v2190
        %v2192 = vmul.f32 %v2191, %v2190
        %v2193 = vmul.f32 %v2192, %v2191
        %v2194 = vmul.f32 0.5, %v2193
        %v2195 = vsub.f32 1.5, %v2194
        %v2196 = vmul.f32 %v2191, %v2195
        %v2197 = vmul.f32 %v2190, %v2196
        %vm2198 = vcmp.eq.f32.partialorder %v2190, inf
        %v2199 = vsel %vm2198, %v2190, %v2197
        %vm2200 = vcmp.eq.f32.partialorder %v2190, 0.0
        %v2201 = vand.u32 %v2190, 2147483648
        %v2202 = vsel %vm2200, %v2201, %v2199
        %v2203 = vadd.f32 %v2202, 1e-06
        %v2204 = vrcp.pop %v2203
        %v2206 = vperm.slane %v2178, 0
        %v2208 = vmul.f32 %v2206, %v2185
        %v2209 = vmul.f32 %v2208, %v2204
        %v2211 = vperm.slane %v2180, 0
        %v2213 = vadd.f32 %v2209, %v2211
        %s2214 = scalar_lea.vmem %s14, 32
        %v2215 = vld [vmem:[%s2214] sm:$0xff]
        %v2216 = vld [vmem:[%s2214 + $0x8] sm:$0xff]
        %v2217 = vld [vmem:[%s2214 + $0x10] sm:$0xff]
        %v2218 = vld [vmem:[%s2214 + $0x18] sm:$0xff]
        %s2219 = scalar_lea.vmem %s15, 1
        %v2220 = vld [vmem:[%s2219] sm:$0x1]
        %v2222 = vperm.slane %v2220, 0
        %v2225 = vsel %vm590, %v2213, 0
        %2227 = vmatpush.msra.mxu0 0.0
        %2228 = vmatpush.msra.mxu0 0.0
        %2229 = vmatpush.msra.mxu0 0.0
        %2230 = vmatpush.msra.mxu0 0.0
        %2231 = vmatpush.msra.mxu0 0.0
        %2232 = vmatpush.msra.mxu0 0.0
        %2233 = vmatpush.msra.mxu0 0.0
        %2234 = vmatpush.msra.mxu0 0.0
        %2235 = vmatpush.msra.mxu0 0.0
        %2236 = vmatpush.msra.mxu0 0.0
        %2237 = vmatpush.msra.mxu0 0.0
        %2238 = vmatpush.msra.mxu0 0.0
        %2239 = vmatpush.msra.mxu0 %v2218
        %2240 = vmatpush.msra.mxu0 %v2217
        %2241 = vmatpush.msra.mxu0 %v2216
        %2242 = vmatpush.msra.mxu0 %v2215
        %2243 = vmatmul.f32.gmra.mxu0 %v2225
        %v2244 = vpop.f32.mrf.mxu0
        %v2245 = vadd.f32 %v2222, %v2244
        %2246 = vdwg.mxu0
        %v2247 = vmax.f32 %v2245, 0.0
        %s2248 = scalar_lea.vmem %s16, 64
        %v2249 = vld [vmem:[%s2248] sm:$0xff]
        %v2250 = vld [vmem:[%s2248 + $0x8] sm:$0xff]
        %v2251 = vld [vmem:[%s2248 + $0x10] sm:$0xff]
        %v2252 = vld [vmem:[%s2248 + $0x18] sm:$0xff]
        %v2253 = vld [vmem:[%s2248 + $0x20] sm:$0xff]
        %v2254 = vld [vmem:[%s2248 + $0x28] sm:$0xff]
        %v2255 = vld [vmem:[%s2248 + $0x30] sm:$0xff]
        %v2256 = vld [vmem:[%s2248 + $0x38] sm:$0xff]
        %v2258 = vsel %vm1406, %v2247, 0
        %2260 = vmatpush.msra.mxu0 0.0
        %2261 = vmatpush.msra.mxu0 0.0
        %2262 = vmatpush.msra.mxu0 0.0
        %2263 = vmatpush.msra.mxu0 0.0
        %2264 = vmatpush.msra.mxu0 0.0
        %2265 = vmatpush.msra.mxu0 0.0
        %2266 = vmatpush.msra.mxu0 0.0
        %2267 = vmatpush.msra.mxu0 0.0
        %2268 = vmatpush.msra.mxu0 %v2256
        %2269 = vmatpush.msra.mxu0 %v2255
        %2270 = vmatpush.msra.mxu0 %v2254
        %2271 = vmatpush.msra.mxu0 %v2253
        %2272 = vmatpush.msra.mxu0 %v2252
        %2273 = vmatpush.msra.mxu0 %v2251
        %2274 = vmatpush.msra.mxu0 %v2250
        %2275 = vmatpush.msra.mxu0 %v2249
        %2276 = vmatmul.f32.gmra.mxu0 %v2258
        %v2277 = vpop.f32.mrf.mxu0
        %v2278 = vadd.f32 0.0, %v2277
        %2279 = vdwg.mxu0
        %v2280 = vadd.f32 %v2176, %v2278
        %s2281 = scalar_lea.vmem %s17, 1
        %v2282 = vld [vmem:[%s2281] sm:$0x1]
        %v2284 = vperm.slane %v2282, 0
        %v2286 = vadd.f32 %v2280, %v2284
        %2287 = vst.msk [vmem:[%s577] sm:$0xff] %vm590, %v2286
        %s2288 = sand.u32 %s428, 1
        %s2289 = scalar_lea.sflag [#allocation3], %s2288
        %s2290 = sand.u32 %s428, 1
        %s2291 = smul.addr %s2290, 8
        %s2292 = scalar_lea.vmem [#allocation2], %s2291
        // Predicated region
        $region93: #{encoder_forward.1} parent=91 // pred_check
          %p2293 = pneg %p438
        $region94: #{encoder_forward.1} parent=91 // pred_check_branch
          %2295 = sbr.rel (%p2293) target = $region96
        $region95: #{encoder_forward.1} parent=91 // pred_region
          %2297 = vsyncadd %s2289, 0
          %s2298 = smul.addr %s32, 8
          %s2299 = scalar_lea.hbm %s18, %s2298
          %s2301 = sshll.u32 %s2292, 4
          %s2302 = int_to_ptr.vmem [resolvable:$true] %s2301
          %s2303 = sshll.u32 %s2299, 4
          %s2304 = int_to_ptr.hbm [resolvable:$true] %s2303
          %2306 = dma.vmem_to_hbm [thread:$0]  %s2302, 128, %s2304, %s2289
        $region96: #{encoder_forward.1} parent=91 // pred_fallthru
          _
      $region92: #{encoder_forward.1} parent=5 // pred_fallthru
        _
      %p2307 = scmp.le.s32.totalorder 2, %s27
      // Predicated region
      $region97: #{encoder_forward.1} parent=5 // pred_check
        %p2308 = pneg %p2307
      $region98: #{encoder_forward.1} parent=5 // pred_check_branch
        %2310 = sbr.rel (%p2308) target = $region100
      $region99: #{encoder_forward.1} parent=5 // pred_region
        %s2311 = ssub.s32 %s27, 2
        // Predicated region
        $region101: #{encoder_forward.1} parent=99 // pred_check
          %p2312 = pneg %p444
        $region102: #{encoder_forward.1} parent=99 // pred_check_branch
          %2314 = sbr.rel (%p2312) target = $region104
        $region103: #{encoder_forward.1} parent=99 // pred_region
          %s2315 = sand.u32 %s429, 1
          %s2316 = scalar_lea.sflag [#allocation3], %s2315
          %s2317 = sand.u32 %s429, 1
          %s2318 = smul.addr %s2317, 8
          %s2319 = scalar_lea.vmem [#allocation2], %s2318
          %2321 = dma.done %s2316, 128
        $region104: #{encoder_forward.1} parent=99 // pred_fallthru
          _
      $region100: #{encoder_forward.1} parent=5 // pred_fallthru
        _
    $region6: #{encoder_forward.1} parent=1 // loop_footer
      %s31 = sadd.s32 1, %s27
    $region7: #{encoder_forward.1} parent=1 // loop_footer_branch
      %26 = sbr.rel target = $region3
    $region8: #{encoder_forward.1} parent=1 // loop_exit
      _
    %2322 = vsyncpa [#allocation3], 1
    %s2323 = scalar_lea.sflag [#allocation3], 1
    %2324 = vsyncpa %s2323, 1

</llo_original>
